<compile_context>
chip_gen: v7x
topology: tpu7x:2x2x1
jax: 0.10.0
libtpu: 0.0.40
codegen_flags: <defaults>
</compile_context>

<pallas_src>
import functools

import numpy as np
import jax
import jax.numpy as jnp
from jax.experimental import pallas as pl
from jax.experimental.pallas import tpu as pltpu


def sam_adapter_kernel(x_ref, w_ref, b_ref, o_ref, acc_ref):
    # x_ref:   (1, N, tk)   bf16 activation tile (tokens x channel-slice)
    # w_ref:   (tk, Cout)   bf16 weight slice (transposed conv weight)
    # b_ref:   (1, Cout)    f32 bias
    # o_ref:   (1, Cout, N) output slab (channels-first, written once at k==last)
    # acc_ref: (N, Cout)    f32 VMEM accumulator, resident across the K axis
    k = pl.program_id(1)

    @pl.when(k == 0)
    def _():
        acc_ref[...] = jnp.zeros_like(acc_ref)

    # bf16 x bf16 -> f32 accumulate on the MXU.
    acc_ref[...] += jnp.dot(x_ref[0], w_ref[...],
                            preferred_element_type=jnp.float32)

    @pl.when(k == pl.num_programs(1) - 1)
    def _():
        y = acc_ref[...] + b_ref[...]              # bias added exactly once
        # Keep the (N,Cout)->(Cout,N) transpose in-kernel (XLU, overlaps MXU).
        o_ref[0] = y.T.astype(o_ref.dtype)


def prepare_sam_adapter_params(conv_w, conv_b):
    """One-time parameter prep (hoisted out of the per-forward path).

    conv_w: [Cout, D]  (Conv2d weight with the trailing 1x1 dims squeezed)
    conv_b: [Cout]
    Returns (w_t, b2d): bf16 [D, Cout] transposed weight, f32 [1, Cout] bias.
    """
    w_t = jnp.asarray(conv_w).T.astype(jnp.bfloat16)
    b2d = jnp.asarray(conv_b).reshape(1, -1).astype(jnp.float32)
    return w_t, b2d


@functools.partial(jax.jit,
                   static_argnames=("spatial_size", "block_k", "out_dtype"))
def sam_adapter_forward(x, w_t, b2d, *, spatial_size=16, block_k=256,
                        out_dtype=jnp.float32):
    """x: [B, N, D]; w_t: [D, Cout] bf16; b2d: [1, Cout] f32 -> [B, Cout, H, W]."""
    B, N, D = x.shape
    Cout = w_t.shape[1]
    assert N == spatial_size * spatial_size
    assert D % block_k == 0, (D, block_k)
    nk = D // block_k

    x_bf16 = x.astype(jnp.bfloat16)

    bytes_accessed = (B * N * D * 2            # x stream (bf16)
                      + D * Cout * 2           # weight stream (bf16)
                      + Cout * 4               # bias
                      + B * Cout * N * np.dtype(out_dtype).itemsize)  # output

    y = pl.pallas_call(
        sam_adapter_kernel,
        out_shape=jax.ShapeDtypeStruct((B, Cout, N), out_dtype),
        grid_spec=pltpu.PrefetchScalarGridSpec(
            num_scalar_prefetch=0,
            grid=(B, nk),
            in_specs=[
                pl.BlockSpec((1, N, block_k), lambda b, k: (b, 0, k)),
                pl.BlockSpec((block_k, Cout), lambda b, k: (k, 0)),
                pl.BlockSpec((1, Cout), lambda b, k: (0, 0)),
            ],
            out_specs=pl.BlockSpec((1, Cout, N), lambda b, k: (b, 0, 0)),
            scratch_shapes=[pltpu.VMEM((N, Cout), jnp.float32)],
        ),
        compiler_params=pltpu.CompilerParams(
            dimension_semantics=("parallel", "arbitrary"),
        ),
        cost_estimate=pl.CostEstimate(
            flops=2 * B * N * D * Cout,
            bytes_accessed=bytes_accessed,
            transcendentals=0,
        ),
    )(x_bf16, w_t, b2d)

    # Free layout glue: [B, Cout, N] -> [B, Cout, H, W]  (NCHW, matches PyTorch)
    return y.reshape(B, Cout, spatial_size, spatial_size)


if __name__ == "__main__":
    # Module defaults: input_dim=1280, output_channels=256, spatial_size=16
    # (N must be 256 because forward hard-codes view(B,16,16,D)).
    B, N, D = 2, 256, 1280
    Cout, S = 256, 16

    key = jax.random.PRNGKey(0)
    kx, kw, kb = jax.random.split(key, 3)

    x = jax.random.normal(kx, (B, N, D), dtype=jnp.float32)
    # Deterministic synthetic Conv2d(1280, 256, 1) params ([Cout, Cin, 1, 1] squeezed)
    conv_w = jax.random.normal(kw, (Cout, D), dtype=jnp.float32) * (1.0 / jnp.sqrt(D))
    conv_b = jax.random.normal(kb, (Cout,), dtype=jnp.float32) * 0.01

    w_t, b2d = prepare_sam_adapter_params(conv_w, conv_b)

    out = sam_adapter_forward(x, w_t, b2d, spatial_size=S)
    out = jax.block_until_ready(out)
    assert out.shape == (B, Cout, S, S), out.shape

    # Reference at matching precision: bf16 inputs, f32 accumulate, then NHWC->NCHW.
    x_bf = x.astype(jnp.bfloat16).astype(jnp.float32)
    w_bf = conv_w.astype(jnp.bfloat16).astype(jnp.float32)
    ref = jnp.einsum("bnd,cd->bnc", x_bf, w_bf,
                     preferred_element_type=jnp.float32) + conv_b
    ref = ref.reshape(B, S, S, Cout).transpose(0, 3, 1, 2)
    assert jnp.allclose(out, ref, rtol=2e-2, atol=2e-2), \
        float(jnp.max(jnp.abs(out - ref)))

    print("KERNEL_OK")
</pallas_src>

<mosaic_0001>
module attributes {stable_mosaic.version = 11 : i64} {
  func.func @sam_adapter_kernel(%arg0: i32, %arg1: i32, %arg2: memref<1x256x256xbf16, #tpu.memory_space<vmem>>, %arg3: memref<256x256xbf16, #tpu.memory_space<vmem>>, %arg4: memref<1x256xf32, #tpu.memory_space<vmem>>, %arg5: memref<1x256x256xf32, #tpu.memory_space<vmem>>, %arg6: memref<256x256xf32, #tpu.memory_space<vmem>>) attributes {dimension_semantics = [#tpu.dimension_semantics<parallel>, #tpu.dimension_semantics<arbitrary>], iteration_bounds = array<i64: 2, 5>, scalar_prefetch = 0 : i64, scratch_operands = 1 : i64, tpu.core_type = #tpu.core_type<tc>, window_params = [{transform_indices = @transform_0, window_bounds = array<i64: 1, 256, 256>}, {transform_indices = @transform_1, window_bounds = array<i64: 256, 256>}, {pipeline_mode = #tpu.pipeline_mode<synchronous>, transform_indices = @transform_2, window_bounds = array<i64: 1, 256>}, {transform_indices = @transform_3, window_bounds = array<i64: 1, 256, 256>}]} {
    %c0_i32 = arith.constant 0 : i32
    %0 = arith.cmpi eq, %arg1, %c0_i32 : i32
    %1 = arith.extui %0 : i1 to i32
    %c0_i32_0 = arith.constant 0 : i32
    %2 = arith.cmpi ne, %1, %c0_i32_0 : i32
    scf.if %2 {
      %cst_10 = arith.constant 0.000000e+00 : f32
      %13 = vector.broadcast %cst_10 : f32 to vector<256x256xf32>
      %c0_11 = arith.constant 0 : index
      %c0_12 = arith.constant 0 : index
      %14 = vector.load %arg6[%c0_11, %c0_12] : memref<256x256xf32, #tpu.memory_space<vmem>>, vector<256x256xf32>
      tpu.vector_store %arg6[%c0_11, %c0_12], %13 {strides = array<i32>} : memref<256x256xf32, #tpu.memory_space<vmem>>, vector<256x256xf32>,
    } else {
    }
    %c0 = arith.constant 0 : index
    %c0_1 = arith.constant 0 : index
    %3 = vector.load %arg6[%c0, %c0_1] : memref<256x256xf32, #tpu.memory_space<vmem>>, vector<256x256xf32>
    %c0_2 = arith.constant 0 : index
    %c0_3 = arith.constant 0 : index
    %c0_4 = arith.constant 0 : index
    %4 = vector.load %arg2[%c0_2, %c0_3, %c0_4] : memref<1x256x256xbf16, #tpu.memory_space<vmem>>, vector<1x256x256xbf16>
    %5 = vector.shape_cast %4 : vector<1x256x256xbf16> to vector<256x256xbf16>
    %c0_5 = arith.constant 0 : index
    %c0_6 = arith.constant 0 : index
    %6 = vector.load %arg3[%c0_5, %c0_6] : memref<256x256xbf16, #tpu.memory_space<vmem>>, vector<256x256xbf16>
    %cst = arith.constant dense<0.000000e+00> : vector<256x256xf32>
    %7 = tpu.matmul %5, %6, %cst {dimension_numbers = #tpu.dot_dimension_numbers<[1], [0], [0], [1], [0, 0, 1, 1], [], []>} : vector<256x256xbf16>, vector<256x256xbf16>, vector<256x256xf32> -> vector<256x256xf32>
    %8 = arith.addf %3, %7 : vector<256x256xf32>
    %c0_7 = arith.constant 0 : index
    %c0_8 = arith.constant 0 : index
    %9 = vector.load %arg6[%c0_7, %c0_8] : memref<256x256xf32, #tpu.memory_space<vmem>>, vector<256x256xf32>
    tpu.vector_store %arg6[%c0_7, %c0_8], %8 {strides = array<i32>} : memref<256x256xf32, #tpu.memory_space<vmem>>, vector<256x256xf32>,
    %c4_i32 = arith.constant 4 : i32
    %10 = arith.cmpi eq, %arg1, %c4_i32 : i32
    %11 = arith.extui %10 : i1 to i32
    %c0_i32_9 = arith.constant 0 : i32
    %12 = arith.cmpi ne, %11, %c0_i32_9 : i32
    scf.if %12 {
      %c0_10 = arith.constant 0 : index
      %c0_11 = arith.constant 0 : index
      %13 = vector.load %arg6[%c0_10, %c0_11] : memref<256x256xf32, #tpu.memory_space<vmem>>, vector<256x256xf32>
      %c0_12 = arith.constant 0 : index
      %c0_13 = arith.constant 0 : index
      %14 = vector.load %arg4[%c0_12, %c0_13] : memref<1x256xf32, #tpu.memory_space<vmem>>, vector<1x256xf32>
      %15 = vector.broadcast %14 : vector<1x256xf32> to vector<256x256xf32>
      %16 = arith.addf %13, %15 : vector<256x256xf32>
      %17 = tpu.transpose %16, [1, 0] : vector<256x256xf32> -> vector<256x256xf32>
      %c0_14 = arith.constant 0 : index
      %c0_15 = arith.constant 0 : index
      %c0_16 = arith.constant 0 : index
      %18 = vector.load %arg5[%c0_14, %c0_15, %c0_16] : memref<1x256x256xf32, #tpu.memory_space<vmem>>, vector<1x256x256xf32>
      %19 = vector.shape_cast %18 : vector<1x256x256xf32> to vector<256x256xf32>
      %20 = vector.shape_cast %17 : vector<256x256xf32> to vector<1x256x256xf32>
      tpu.vector_store %arg5[%c0_14, %c0_15, %c0_16], %20 {strides = array<i32>} : memref<1x256x256xf32, #tpu.memory_space<vmem>>, vector<1x256x256xf32>,
    } else {
    }
    return
  }
  func.func @transform_0(%arg0: i32, %arg1: i32) -> (i32, i32, i32) {
    %c0_i32 = arith.constant 0 : i32
    %c0_i32_0 = arith.constant 0 : i32
    return %arg0, %c0_i32, %arg1 : i32, i32, i32
  }
  func.func @transform_1(%arg0: i32, %arg1: i32) -> (i32, i32) {
    %c0_i32 = arith.constant 0 : i32
    %c0_i32_0 = arith.constant 0 : i32
    return %arg1, %c0_i32 : i32, i32
  }
  func.func @transform_2(%arg0: i32, %arg1: i32) -> (i32, i32) {
    %c0_i32 = arith.constant 0 : i32
    %c0_i32_0 = arith.constant 0 : i32
    %c0_i32_1 = arith.constant 0 : i32
    return %c0_i32, %c0_i32_0 : i32, i32
  }
  func.func @transform_3(%arg0: i32, %arg1: i32) -> (i32, i32, i32) {
    %c0_i32 = arith.constant 0 : i32
    %c0_i32_0 = arith.constant 0 : i32
    %c0_i32_1 = arith.constant 0 : i32
    return %arg0, %c0_i32, %c0_i32_0 : i32, i32, i32
  }
}

</mosaic_0001>

<llo_original>
// kernel: sam_adapter_forward.1
$region0: #{sam_adapter_forward.1}
  #allocation0 [shape = 'u32[]', space=smem, size = 0x4, offset = 0x4, fixed_abs, tag = 'smem constant byte address 0x4 - core index']
  #allocation1 [shape = 'u32[144,128]{1,0:T(1,128)}', space=vmem, size = 0x12000, scoped, tag = 'internal scratch']
  #allocation2 [shape = 'f32[256,256]{1,0:T(8,128)}', space=vmem, size = 0x40000, scoped, tag = 'scratch operand']
  %s0 = inlined_call_operand.vmem [shape: bf16[2,256,1280], index: 0, kind: input, shape index: {}]
  %s1 = inlined_call_operand.vmem [shape: bf16[1280,256], index: 1, kind: input, shape index: {}]
  %s2 = inlined_call_operand.vmem [shape: f32[1,256], index: 2, kind: input, shape index: {}]
  %s3 = inlined_call_operand.vmem [shape: f32[2,256,256], index: 3, kind: output, shape index: {}]
  %s4 = sld [smem:[#allocation0]]
  $region91: #{sam_adapter_forward.1} parent=0
    _
  %s6 = ssub.s32 1, %s4
  %s7 = scalar_select 0, %s6, %s4
  $region1: #{sam_adapter_forward.1} parent=0
    #allocation3 [shape = 'u8[262144]{0}', space=vmem, size = 0x40000, scoped, tag = 'input window, operand 0']
    loop: start=0, step=1, limit=12
    $region2: #{sam_adapter_forward.1} parent=1 // loop_pre_header
      _
    $region3: #{sam_adapter_forward.1} parent=1 // loop_header
      %s9 = sphi 0, %s13
      %p10 = scmp.ge.s32.totalorder %s9, 12
      %s16 = sphi 0, %s28
      %s17 = sphi 0, %s24
      %s18 = sphi 0, %s16
      %s19 = sphi 0, %s17
      %s20 = sphi 0, %s18
      %s21 = sphi 0, %s19
      %s33 = sphi 0, %s35
      %s36 = sphi 0, %s33
      %s37 = sphi 0, %s36
      %s53 = sphi 0, %s37
      %s59 = sphi 0, %s61
      %s62 = sphi 0, %s59
      %s63 = sphi 0, %s62
      %s79 = sphi 0, %s63
      %s83 = sphi 0, %s83
      %s85 = sphi 0, %s83
      %s86 = sphi 0, %s85
      %s100 = sphi 0, %s86
      %s106 = sphi 0, %s108
      %s109 = sphi 0, %s106
      %s110 = sphi 0, %s109
      %s126 = sphi 0, %s110
    $region4: #{sam_adapter_forward.1} parent=1 // loop_header_branch
      %12 = sbr.rel (%p10) target = $region8
    $region5: #{sam_adapter_forward.1} parent=1 // loop_body
      %s14 = ssub.s32 %s9, 1
      %s15 = ssub.s32 %s9, 2
      %s22 = sadd.s32 1, %s17
      %p23 = scmp.ge.s32.totalorder %s22, 5
      %s24 = scalar_select %p23, 0, %s22
      %s25 = sadd.s32 1, %s16
      %s26 = scalar_select %p23, %s25, %s16
      %p27 = scmp.ge.s32.totalorder %s26, 2
      %s28 = scalar_select %p27, 0, %s26
      %s29 = ssub.s32 %s16, %s28
      %s30 = ssub.s32 %s17, %s24
      %s31 = sor.u32 %s29, %s30
      %p32 = scmp.eq.s32.totalorder %s31, 0
      %s34 = sadd.s32 %s33, 1
      %s35 = scalar_select %p32, %s33, %s34
      %p38 = pneg %p32
      %p39 = scmp.eq.s32.totalorder %s9, 9
      %p40 = por %p38, %p39
      %p41 = scmp.ne.s32.totalorder %s33, %s36
      %p42 = scmp.eq.s32.totalorder %s9, 0
      %p43 = por %p41, %p42
      %p44 = scmp.ne.s32.totalorder %s33, %s36
      %p45 = scmp.eq.s32.totalorder %s14, 9
      %p46 = por %p44, %p45
      %p47 = scmp.ne.s32.totalorder %s36, %s37
      %p48 = scmp.eq.s32.totalorder %s14, 0
      %p49 = por %p47, %p48
      %p50 = scmp.ne.s32.totalorder %s36, %s37
      %p51 = scmp.eq.s32.totalorder %s15, 9
      %p52 = por %p50, %p51
      %p54 = scmp.ne.s32.totalorder %s37, %s53
      %p55 = scmp.eq.s32.totalorder %s15, 0
      %p56 = por %p54, %p55
      %s57 = ssub.s32 %s17, %s24
      %p58 = scmp.eq.s32.totalorder %s57, 0
      %s60 = sadd.s32 %s59, 1
      %s61 = scalar_select %p58, %s59, %s60
      %p64 = pneg %p58
      %p65 = scmp.eq.s32.totalorder %s9, 9
      %p66 = por %p64, %p65
      %p67 = scmp.ne.s32.totalorder %s59, %s62
      %p68 = scmp.eq.s32.totalorder %s9, 0
      %p69 = por %p67, %p68
      %p70 = scmp.ne.s32.totalorder %s59, %s62
      %p71 = scmp.eq.s32.totalorder %s14, 9
      %p72 = por %p70, %p71
      %p73 = scmp.ne.s32.totalorder %s62, %s63
      %p74 = scmp.eq.s32.totalorder %s14, 0
      %p75 = por %p73, %p74
      %p76 = scmp.ne.s32.totalorder %s62, %s63
      %p77 = scmp.eq.s32.totalorder %s15, 9
      %p78 = por %p76, %p77
      %p80 = scmp.ne.s32.totalorder %s63, %s79
      %p81 = scmp.eq.s32.totalorder %s15, 0
      %p82 = por %p80, %p81
      %s84 = sadd.s32 %s83, 1
      %p87 = scmp.eq.s32.totalorder %s9, 9
      %p88 = scmp.ne.s32.totalorder %s83, %s85
      %p89 = scmp.eq.s32.totalorder %s9, 0
      %p90 = por %p88, %p89
      %p91 = scmp.ne.s32.totalorder %s83, %s85
      %p92 = scmp.eq.s32.totalorder %s14, 9
      %p93 = por %p91, %p92
      %p94 = scmp.ne.s32.totalorder %s85, %s86
      %p95 = scmp.eq.s32.totalorder %s14, 0
      %p96 = por %p94, %p95
      %p97 = scmp.ne.s32.totalorder %s85, %s86
      %p98 = scmp.eq.s32.totalorder %s15, 9
      %p99 = por %p97, %p98
      %p101 = scmp.ne.s32.totalorder %s86, %s100
      %p102 = scmp.eq.s32.totalorder %s15, 0
      %p103 = por %p101, %p102
      %s104 = ssub.s32 %s16, %s28
      %p105 = scmp.eq.s32.totalorder %s104, 0
      %s107 = sadd.s32 %s106, 1
      %s108 = scalar_select %p105, %s106, %s107
      %p111 = pneg %p105
      %p112 = scmp.eq.s32.totalorder %s9, 9
      %p113 = por %p111, %p112
      %p114 = scmp.ne.s32.totalorder %s106, %s109
      %p115 = scmp.eq.s32.totalorder %s9, 0
      %p116 = por %p114, %p115
      %p117 = scmp.ne.s32.totalorder %s106, %s109
      %p118 = scmp.eq.s32.totalorder %s14, 9
      %p119 = por %p117, %p118
      %p120 = scmp.ne.s32.totalorder %s109, %s110
      %p121 = scmp.eq.s32.totalorder %s14, 0
      %p122 = por %p120, %p121
      %p123 = scmp.ne.s32.totalorder %s109, %s110
      %p124 = scmp.eq.s32.totalorder %s15, 9
      %p125 = por %p123, %p124
      %p127 = scmp.ne.s32.totalorder %s110, %s126
      %p128 = scmp.eq.s32.totalorder %s15, 0
      %p129 = por %p127, %p128
      %p130 = scmp.le.s32.totalorder 1, %s9
      %p131 = scmp.lt.s32.totalorder %s9, 11
      %p132 = pnand %p130, %p131
      %p133 = pneg %p132
      // Predicated region
      $region9: #{sam_adapter_forward.1} parent=5 // pred_check
        _
      $region10: #{sam_adapter_forward.1} parent=5 // pred_check_branch
        %135 = sbr.rel (%p132) target = $region12
      $region11: #{sam_adapter_forward.1} parent=5 // pred_region
        %s136 = ssub.s32 %s9, 1
        // Predicated region
        $region13: #{sam_adapter_forward.1} parent=11 // pred_check
          %p137 = pneg %p96
        $region14: #{sam_adapter_forward.1} parent=11 // pred_check_branch
          %139 = sbr.rel (%p137) target = $region16
        $region15: #{sam_adapter_forward.1} parent=11 // pred_region
          _
        $region16: #{sam_adapter_forward.1} parent=11 // pred_fallthru
          _
      $region12: #{sam_adapter_forward.1} parent=5 // pred_fallthru
        _
      %p140 = scmp.lt.s32.totalorder %s9, 10
      // Predicated region
      $region17: #{sam_adapter_forward.1} parent=5 // pred_check
        %p141 = pneg %p140
      $region18: #{sam_adapter_forward.1} parent=5 // pred_check_branch
        %143 = sbr.rel (%p141) target = $region20
      $region19: #{sam_adapter_forward.1} parent=5 // pred_region
        // Predicated region
        $region21: #{sam_adapter_forward.1} parent=19 // pred_check
          %p144 = pneg %p43
        $region22: #{sam_adapter_forward.1} parent=19 // pred_check_branch
          %146 = sbr.rel (%p144) target = $region24
        $region23: #{sam_adapter_forward.1} parent=19 // pred_region
          %s147 = sand.u32 %s33, 1
          %s148 = sand.u32 %s33, 1
          %s149 = smul.addr %s148, 256
          %s150 = scalar_lea.vmem [#allocation3], %s149
          %s151 = smul.u32 2, %s17
          %s152 = smul.addr %s16, 320
          %s153 = sadd.s32 %s151, %s152
          %s154 = smul.addr %s153, 4
          %s155 = scalar_lea.vmem %s0, %s154
          // Predicated region
          $region25: #{sam_adapter_forward.1} parent=23 // pred_check
            _
          $region26: #{sam_adapter_forward.1} parent=23 // pred_check_branch
            %157 = sbr.rel (0) target = $region28
          $region27: #{sam_adapter_forward.1} parent=23 // pred_region
            // Predicated region
            $region29: #{sam_adapter_forward.1} parent=27 // pred_check
              _
            $region30: #{sam_adapter_forward.1} parent=27 // pred_check_branch
              %159 = sbr.rel (0) target = $region32
            $region31: #{sam_adapter_forward.1} parent=27 // pred_region
              // Predicated region
              $region44: #{sam_adapter_forward.1} parent=31 // pred_check
                _
              $region45: #{sam_adapter_forward.1} parent=31 // pred_check_branch
                %236 = sbr.rel (0) target = $region47
              $region46: #{sam_adapter_forward.1} parent=31 // pred_region
                loop: start=0, step=1, limit=1
                $region48: #{sam_adapter_forward.1} parent=46 // loop_pre_header
                  _
                $region49: #{sam_adapter_forward.1} parent=46 // loop_header
                  %s238 = sphi 0, %s242
                  %p239 = scmp.ge.s32.totalorder %s238, 1
                  %s243 = sphi %s155, %s155
                  %s244 = sphi %s150, %s150
                $region50: #{sam_adapter_forward.1} parent=46 // loop_header_branch
                  %241 = sbr.rel (%p239) target = $region54
                $region51: #{sam_adapter_forward.1} parent=46 // loop_body
                  %v245 = vld [vmem:[%s243] sm:$0xff]
                  %246 = vst [vmem:[%s244] sm:$0xff] %v245
                  %v247 = vld [vmem:[%s243 + $0x28] sm:$0xff]
                  %248 = vst [vmem:[%s244 + $0x8] sm:$0xff] %v247
                  %v249 = vld [vmem:[%s243 + $0x50] sm:$0xff]
                  %250 = vst [vmem:[%s244 + $0x10] sm:$0xff] %v249
                  %v251 = vld [vmem:[%s243 + $0x78] sm:$0xff]
                  %252 = vst [vmem:[%s244 + $0x18] sm:$0xff] %v251
                  %v253 = vld [vmem:[%s243 + $0xa0] sm:$0xff]
                  %254 = vst [vmem:[%s244 + $0x20] sm:$0xff] %v253
                  %v255 = vld [vmem:[%s243 + $0xc8] sm:$0xff]
                  %256 = vst [vmem:[%s244 + $0x28] sm:$0xff] %v255
                  %v257 = vld [vmem:[%s243 + $0xf0] sm:$0xff]
                  %258 = vst [vmem:[%s244 + $0x30] sm:$0xff] %v257
                  %v259 = vld [vmem:[%s243 + $0x118] sm:$0xff]
                  %260 = vst [vmem:[%s244 + $0x38] sm:$0xff] %v259
                  %v261 = vld [vmem:[%s243 + $0x140] sm:$0xff]
                  %262 = vst [vmem:[%s244 + $0x40] sm:$0xff] %v261
                  %v263 = vld [vmem:[%s243 + $0x168] sm:$0xff]
                  %264 = vst [vmem:[%s244 + $0x48] sm:$0xff] %v263
                  %v265 = vld [vmem:[%s243 + $0x190] sm:$0xff]
                  %266 = vst [vmem:[%s244 + $0x50] sm:$0xff] %v265
                  %v267 = vld [vmem:[%s243 + $0x1b8] sm:$0xff]
                  %268 = vst [vmem:[%s244 + $0x58] sm:$0xff] %v267
                  %v269 = vld [vmem:[%s243 + $0x1e0] sm:$0xff]
                  %270 = vst [vmem:[%s244 + $0x60] sm:$0xff] %v269
                  %v271 = vld [vmem:[%s243 + $0x208] sm:$0xff]
                  %272 = vst [vmem:[%s244 + $0x68] sm:$0xff] %v271
                  %v273 = vld [vmem:[%s243 + $0x230] sm:$0xff]
                  %274 = vst [vmem:[%s244 + $0x70] sm:$0xff] %v273
                  %v275 = vld [vmem:[%s243 + $0x258] sm:$0xff]
                  %276 = vst [vmem:[%s244 + $0x78] sm:$0xff] %v275
                  %v277 = vld [vmem:[%s243 + $0x280] sm:$0xff]
                  %278 = vst [vmem:[%s244 + $0x80] sm:$0xff] %v277
                  %v279 = vld [vmem:[%s243 + $0x2a8] sm:$0xff]
                  %280 = vst [vmem:[%s244 + $0x88] sm:$0xff] %v279
                  %v281 = vld [vmem:[%s243 + $0x2d0] sm:$0xff]
                  %282 = vst [vmem:[%s244 + $0x90] sm:$0xff] %v281
                  %v283 = vld [vmem:[%s243 + $0x2f8] sm:$0xff]
                  %284 = vst [vmem:[%s244 + $0x98] sm:$0xff] %v283
                  %v285 = vld [vmem:[%s243 + $0x320] sm:$0xff]
                  %286 = vst [vmem:[%s244 + $0xa0] sm:$0xff] %v285
                  %v287 = vld [vmem:[%s243 + $0x348] sm:$0xff]
                  %288 = vst [vmem:[%s244 + $0xa8] sm:$0xff] %v287
                  %v289 = vld [vmem:[%s243 + $0x370] sm:$0xff]
                  %290 = vst [vmem:[%s244 + $0xb0] sm:$0xff] %v289
                  %v291 = vld [vmem:[%s243 + $0x398] sm:$0xff]
                  %292 = vst [vmem:[%s244 + $0xb8] sm:$0xff] %v291
                  %v293 = vld [vmem:[%s243 + $0x3c0] sm:$0xff]
                  %294 = vst [vmem:[%s244 + $0xc0] sm:$0xff] %v293
                  %v295 = vld [vmem:[%s243 + $0x3e8] sm:$0xff]
                  %296 = vst [vmem:[%s244 + $0xc8] sm:$0xff] %v295
                  %v297 = vld [vmem:[%s243 + $0x410] sm:$0xff]
                  %298 = vst [vmem:[%s244 + $0xd0] sm:$0xff] %v297
                  %v299 = vld [vmem:[%s243 + $0x438] sm:$0xff]
                  %300 = vst [vmem:[%s244 + $0xd8] sm:$0xff] %v299
                  %v301 = vld [vmem:[%s243 + $0x460] sm:$0xff]
                  %302 = vst [vmem:[%s244 + $0xe0] sm:$0xff] %v301
                  %v303 = vld [vmem:[%s243 + $0x488] sm:$0xff]
                  %304 = vst [vmem:[%s244 + $0xe8] sm:$0xff] %v303
                  %v305 = vld [vmem:[%s243 + $0x4b0] sm:$0xff]
                  %306 = vst [vmem:[%s244 + $0xf0] sm:$0xff] %v305
                  %v307 = vld [vmem:[%s243 + $0x4d8] sm:$0xff]
                  %308 = vst [vmem:[%s244 + $0xf8] sm:$0xff] %v307
                $region52: #{sam_adapter_forward.1} parent=46 // loop_footer
                  %s242 = sadd.s32 1, %s238
                $region53: #{sam_adapter_forward.1} parent=46 // loop_footer_branch
                  %237 = sbr.rel target = $region49
                $region54: #{sam_adapter_forward.1} parent=46 // loop_exit
                  _
              $region47: #{sam_adapter_forward.1} parent=31 // pred_fallthru
                _
              // Predicated region
              $region55: #{sam_adapter_forward.1} parent=31 // pred_check
                _
              $region56: #{sam_adapter_forward.1} parent=31 // pred_check_branch
                %310 = sbr.rel target = $region58
              $region57: #{sam_adapter_forward.1} parent=31 // pred_region
                _
              $region58: #{sam_adapter_forward.1} parent=31 // pred_fallthru
                _
            $region32: #{sam_adapter_forward.1} parent=27 // pred_fallthru
              _
            // Predicated region
            $region33: #{sam_adapter_forward.1} parent=27 // pred_check
              _
            $region34: #{sam_adapter_forward.1} parent=27 // pred_check_branch
              %161 = sbr.rel target = $region36
            $region35: #{sam_adapter_forward.1} parent=27 // pred_region
              loop: start=0, step=1, limit=1
              $region37: #{sam_adapter_forward.1} parent=35 // loop_pre_header
                _
              $region38: #{sam_adapter_forward.1} parent=35 // loop_header
                %s164 = sphi 0, %s168
                %p165 = scmp.ge.s32.totalorder %s164, 1
                %s169 = sphi %s155, %s155
                %s170 = sphi %s150, %s150
              $region39: #{sam_adapter_forward.1} parent=35 // loop_header_branch
                %167 = sbr.rel (%p165) target = $region43
              $region40: #{sam_adapter_forward.1} parent=35 // loop_body
                %v171 = vld [vmem:[%s169] sm:$0xff]
                %172 = vst [vmem:[%s170] sm:$0xff] %v171
                %v173 = vld [vmem:[%s169 + $0x28] sm:$0xff]
                %174 = vst [vmem:[%s170 + $0x8] sm:$0xff] %v173
                %v175 = vld [vmem:[%s169 + $0x50] sm:$0xff]
                %176 = vst [vmem:[%s170 + $0x10] sm:$0xff] %v175
                %v177 = vld [vmem:[%s169 + $0x78] sm:$0xff]
                %178 = vst [vmem:[%s170 + $0x18] sm:$0xff] %v177
                %v179 = vld [vmem:[%s169 + $0xa0] sm:$0xff]
                %180 = vst [vmem:[%s170 + $0x20] sm:$0xff] %v179
                %v181 = vld [vmem:[%s169 + $0xc8] sm:$0xff]
                %182 = vst [vmem:[%s170 + $0x28] sm:$0xff] %v181
                %v183 = vld [vmem:[%s169 + $0xf0] sm:$0xff]
                %184 = vst [vmem:[%s170 + $0x30] sm:$0xff] %v183
                %v185 = vld [vmem:[%s169 + $0x118] sm:$0xff]
                %186 = vst [vmem:[%s170 + $0x38] sm:$0xff] %v185
                %v187 = vld [vmem:[%s169 + $0x140] sm:$0xff]
                %188 = vst [vmem:[%s170 + $0x40] sm:$0xff] %v187
                %v189 = vld [vmem:[%s169 + $0x168] sm:$0xff]
                %190 = vst [vmem:[%s170 + $0x48] sm:$0xff] %v189
                %v191 = vld [vmem:[%s169 + $0x190] sm:$0xff]
                %192 = vst [vmem:[%s170 + $0x50] sm:$0xff] %v191
                %v193 = vld [vmem:[%s169 + $0x1b8] sm:$0xff]
                %194 = vst [vmem:[%s170 + $0x58] sm:$0xff] %v193
                %v195 = vld [vmem:[%s169 + $0x1e0] sm:$0xff]
                %196 = vst [vmem:[%s170 + $0x60] sm:$0xff] %v195
                %v197 = vld [vmem:[%s169 + $0x208] sm:$0xff]
                %198 = vst [vmem:[%s170 + $0x68] sm:$0xff] %v197
                %v199 = vld [vmem:[%s169 + $0x230] sm:$0xff]
                %200 = vst [vmem:[%s170 + $0x70] sm:$0xff] %v199
                %v201 = vld [vmem:[%s169 + $0x258] sm:$0xff]
                %202 = vst [vmem:[%s170 + $0x78] sm:$0xff] %v201
                %v203 = vld [vmem:[%s169 + $0x280] sm:$0xff]
                %204 = vst [vmem:[%s170 + $0x80] sm:$0xff] %v203
                %v205 = vld [vmem:[%s169 + $0x2a8] sm:$0xff]
                %206 = vst [vmem:[%s170 + $0x88] sm:$0xff] %v205
                %v207 = vld [vmem:[%s169 + $0x2d0] sm:$0xff]
                %208 = vst [vmem:[%s170 + $0x90] sm:$0xff] %v207
                %v209 = vld [vmem:[%s169 + $0x2f8] sm:$0xff]
                %210 = vst [vmem:[%s170 + $0x98] sm:$0xff] %v209
                %v211 = vld [vmem:[%s169 + $0x320] sm:$0xff]
                %212 = vst [vmem:[%s170 + $0xa0] sm:$0xff] %v211
                %v213 = vld [vmem:[%s169 + $0x348] sm:$0xff]
                %214 = vst [vmem:[%s170 + $0xa8] sm:$0xff] %v213
                %v215 = vld [vmem:[%s169 + $0x370] sm:$0xff]
                %216 = vst [vmem:[%s170 + $0xb0] sm:$0xff] %v215
                %v217 = vld [vmem:[%s169 + $0x398] sm:$0xff]
                %218 = vst [vmem:[%s170 + $0xb8] sm:$0xff] %v217
                %v219 = vld [vmem:[%s169 + $0x3c0] sm:$0xff]
                %220 = vst [vmem:[%s170 + $0xc0] sm:$0xff] %v219
                %v221 = vld [vmem:[%s169 + $0x3e8] sm:$0xff]
                %222 = vst [vmem:[%s170 + $0xc8] sm:$0xff] %v221
                %v223 = vld [vmem:[%s169 + $0x410] sm:$0xff]
                %224 = vst [vmem:[%s170 + $0xd0] sm:$0xff] %v223
                %v225 = vld [vmem:[%s169 + $0x438] sm:$0xff]
                %226 = vst [vmem:[%s170 + $0xd8] sm:$0xff] %v225
                %v227 = vld [vmem:[%s169 + $0x460] sm:$0xff]
                %228 = vst [vmem:[%s170 + $0xe0] sm:$0xff] %v227
                %v229 = vld [vmem:[%s169 + $0x488] sm:$0xff]
                %230 = vst [vmem:[%s170 + $0xe8] sm:$0xff] %v229
                %v231 = vld [vmem:[%s169 + $0x4b0] sm:$0xff]
                %232 = vst [vmem:[%s170 + $0xf0] sm:$0xff] %v231
                %v233 = vld [vmem:[%s169 + $0x4d8] sm:$0xff]
                %234 = vst [vmem:[%s170 + $0xf8] sm:$0xff] %v233
              $region41: #{sam_adapter_forward.1} parent=35 // loop_footer
                %s168 = sadd.s32 1, %s164
              $region42: #{sam_adapter_forward.1} parent=35 // loop_footer_branch
                %163 = sbr.rel target = $region38
              $region43: #{sam_adapter_forward.1} parent=35 // loop_exit
                _
            $region36: #{sam_adapter_forward.1} parent=27 // pred_fallthru
              _
          $region28: #{sam_adapter_forward.1} parent=23 // pred_fallthru
            _
          %311 = vnop
        $region24: #{sam_adapter_forward.1} parent=19 // pred_fallthru
          _
        // Predicated region
        $region59: #{sam_adapter_forward.1} parent=19 // pred_check
          %p312 = pneg %p69
        $region60: #{sam_adapter_forward.1} parent=19 // pred_check_branch
          %314 = sbr.rel (%p312) target = $region62
        $region61: #{sam_adapter_forward.1} parent=19 // pred_region
          %s315 = smul.u32 32, %s17
          %p316 = scmp.lt.s32.totalorder %s315, 159
          %s317 = scalar_select %p316, %s315, 159
          %s318 = smul.addr %s317, 2
          %s319 = smul.addr %s318, 4
          %s320 = scalar_lea.vmem %s1, %s319
          %s321 = smul.u32 32, %s17
        $region62: #{sam_adapter_forward.1} parent=19 // pred_fallthru
          _
      $region20: #{sam_adapter_forward.1} parent=5 // pred_fallthru
        _
      %p322 = scmp.le.s32.totalorder 1, %s9
      %p323 = scmp.lt.s32.totalorder %s9, 11
      %p324 = pnand %p322, %p323
      %p325 = pneg %p324
      // Predicated region
      $region63: #{sam_adapter_forward.1} parent=5 // pred_check
        _
      $region64: #{sam_adapter_forward.1} parent=5 // pred_check_branch
        %327 = sbr.rel (%p324) target = $region66
      $region65: #{sam_adapter_forward.1} parent=5 // pred_region
        %s328 = ssub.s32 %s9, 1
        %s329 = sand.u32 %s36, 1
        %s330 = sand.u32 %s36, 1
        %s331 = smul.addr %s330, 256
        %s332 = scalar_lea.vmem [#allocation3], %s331
        // Predicated region
        $region67: #{sam_adapter_forward.1} parent=65 // pred_check
          %p333 = pneg %p49
        $region68: #{sam_adapter_forward.1} parent=65 // pred_check_branch
          %335 = sbr.rel (%p333) target = $region70
        $region69: #{sam_adapter_forward.1} parent=65 // pred_region
          _
        $region70: #{sam_adapter_forward.1} parent=65 // pred_fallthru
          _
        %s336 = sand.u32 %s36, 1
        %s337 = sand.u32 %s36, 1
        %s338 = smul.addr %s337, 256
        %s339 = scalar_lea.vmem [#allocation3], %s338
        %p340 = pneg %p49
        %p341 = pneg %p46
        %s342 = smul.u32 32, %s19
        %p343 = scmp.lt.s32.totalorder %s342, 159
        %s344 = scalar_select %p343, %s342, 159
        %s345 = smul.addr %s344, 2
        %s346 = smul.addr %s345, 4
        %s347 = scalar_lea.vmem %s1, %s346
        %p348 = pneg %p75
        %p349 = pneg %p72
        %p350 = pneg %p96
        %p351 = pneg %p93
        %p352 = pneg %p122
        %p353 = pneg %p119
        %p354 = scmp.lt.s32.totalorder %s18, 1
        %s355 = scalar_select %p354, %s18, 1
        %s356 = smul.addr %s355, 64
        %s357 = smul.addr %s356, 8
        %s358 = scalar_lea.vmem %s3, %s357
        %s359 = smul.u32 2, %s19
        %s360 = smul.u32 32, %s19
        %p361 = scmp.lt.s32.totalorder %s360, 159
        %s362 = scalar_select %p361, %s360, 159
        %s363 = smul.addr %s362, 2
        %s364 = smul.addr %s363, 4
        %s365 = scalar_lea.vmem %s1, %s364
        %s366 = smul.u32 32, %s19
        %p367 = scmp.lt.s32.totalorder %s18, 1
        %s368 = scalar_select %p367, %s18, 1
        %s369 = smul.addr %s368, 64
        %s370 = smul.addr %s369, 8
        %s371 = scalar_lea.vmem %s3, %s370
        %p372 = scmp.eq.s32.totalorder %s19, 0
        // Predicated region
        $region71: #{sam_adapter_forward.1} parent=65 // pred_check
          %p373 = pneg %p372
        $region72: #{sam_adapter_forward.1} parent=65 // pred_check_branch
          %375 = sbr.rel (%p373) target = $region74
        $region73: #{sam_adapter_forward.1} parent=65 // pred_region
          %376 = vst [vmem:[#allocation2] sm:$0xff] 0.0
          %377 = vst [vmem:[#allocation2 + $0x8] sm:$0xff] 0.0
          %378 = vst [vmem:[#allocation2 + $0x10] sm:$0xff] 0.0
          %379 = vst [vmem:[#allocation2 + $0x18] sm:$0xff] 0.0
          %380 = vst [vmem:[#allocation2 + $0x20] sm:$0xff] 0.0
          %381 = vst [vmem:[#allocation2 + $0x28] sm:$0xff] 0.0
          %382 = vst [vmem:[#allocation2 + $0x30] sm:$0xff] 0.0
          %383 = vst [vmem:[#allocation2 + $0x38] sm:$0xff] 0.0
          %384 = vst [vmem:[#allocation2 + $0x40] sm:$0xff] 0.0
          %385 = vst [vmem:[#allocation2 + $0x48] sm:$0xff] 0.0
          %386 = vst [vmem:[#allocation2 + $0x50] sm:$0xff] 0.0
          %387 = vst [vmem:[#allocation2 + $0x58] sm:$0xff] 0.0
          %388 = vst [vmem:[#allocation2 + $0x60] sm:$0xff] 0.0
          %389 = vst [vmem:[#allocation2 + $0x68] sm:$0xff] 0.0
          %390 = vst [vmem:[#allocation2 + $0x70] sm:$0xff] 0.0
          %391 = vst [vmem:[#allocation2 + $0x78] sm:$0xff] 0.0
          %392 = vst [vmem:[#allocation2 + $0x80] sm:$0xff] 0.0
          %393 = vst [vmem:[#allocation2 + $0x88] sm:$0xff] 0.0
          %394 = vst [vmem:[#allocation2 + $0x90] sm:$0xff] 0.0
          %395 = vst [vmem:[#allocation2 + $0x98] sm:$0xff] 0.0
          %396 = vst [vmem:[#allocation2 + $0xa0] sm:$0xff] 0.0
          %397 = vst [vmem:[#allocation2 + $0xa8] sm:$0xff] 0.0
          %398 = vst [vmem:[#allocation2 + $0xb0] sm:$0xff] 0.0
          %399 = vst [vmem:[#allocation2 + $0xb8] sm:$0xff] 0.0
          %400 = vst [vmem:[#allocation2 + $0xc0] sm:$0xff] 0.0
          %401 = vst [vmem:[#allocation2 + $0xc8] sm:$0xff] 0.0
          %402 = vst [vmem:[#allocation2 + $0xd0] sm:$0xff] 0.0
          %403 = vst [vmem:[#allocation2 + $0xd8] sm:$0xff] 0.0
          %404 = vst [vmem:[#allocation2 + $0xe0] sm:$0xff] 0.0
          %405 = vst [vmem:[#allocation2 + $0xe8] sm:$0xff] 0.0
          %406 = vst [vmem:[#allocation2 + $0xf0] sm:$0xff] 0.0
          %407 = vst [vmem:[#allocation2 + $0xf8] sm:$0xff] 0.0
          %408 = vst [vmem:[#allocation2 + $0x100] sm:$0xff] 0.0
          %409 = vst [vmem:[#allocation2 + $0x108] sm:$0xff] 0.0
          %410 = vst [vmem:[#allocation2 + $0x110] sm:$0xff] 0.0
          %411 = vst [vmem:[#allocation2 + $0x118] sm:$0xff] 0.0
          %412 = vst [vmem:[#allocation2 + $0x120] sm:$0xff] 0.0
          %413 = vst [vmem:[#allocation2 + $0x128] sm:$0xff] 0.0
          %414 = vst [vmem:[#allocation2 + $0x130] sm:$0xff] 0.0
          %415 = vst [vmem:[#allocation2 + $0x138] sm:$0xff] 0.0
          %416 = vst [vmem:[#allocation2 + $0x140] sm:$0xff] 0.0
          %417 = vst [vmem:[#allocation2 + $0x148] sm:$0xff] 0.0
          %418 = vst [vmem:[#allocation2 + $0x150] sm:$0xff] 0.0
          %419 = vst [vmem:[#allocation2 + $0x158] sm:$0xff] 0.0
          %420 = vst [vmem:[#allocation2 + $0x160] sm:$0xff] 0.0
          %421 = vst [vmem:[#allocation2 + $0x168] sm:$0xff] 0.0
          %422 = vst [vmem:[#allocation2 + $0x170] sm:$0xff] 0.0
          %423 = vst [vmem:[#allocation2 + $0x178] sm:$0xff] 0.0
          %424 = vst [vmem:[#allocation2 + $0x180] sm:$0xff] 0.0
          %425 = vst [vmem:[#allocation2 + $0x188] sm:$0xff] 0.0
          %426 = vst [vmem:[#allocation2 + $0x190] sm:$0xff] 0.0
          %427 = vst [vmem:[#allocation2 + $0x198] sm:$0xff] 0.0
          %428 = vst [vmem:[#allocation2 + $0x1a0] sm:$0xff] 0.0
          %429 = vst [vmem:[#allocation2 + $0x1a8] sm:$0xff] 0.0
          %430 = vst [vmem:[#allocation2 + $0x1b0] sm:$0xff] 0.0
          %431 = vst [vmem:[#allocation2 + $0x1b8] sm:$0xff] 0.0
          %432 = vst [vmem:[#allocation2 + $0x1c0] sm:$0xff] 0.0
          %433 = vst [vmem:[#allocation2 + $0x1c8] sm:$0xff] 0.0
          %434 = vst [vmem:[#allocation2 + $0x1d0] sm:$0xff] 0.0
          %435 = vst [vmem:[#allocation2 + $0x1d8] sm:$0xff] 0.0
          %436 = vst [vmem:[#allocation2 + $0x1e0] sm:$0xff] 0.0
          %437 = vst [vmem:[#allocation2 + $0x1e8] sm:$0xff] 0.0
          %438 = vst [vmem:[#allocation2 + $0x1f0] sm:$0xff] 0.0
          %439 = vst [vmem:[#allocation2 + $0x1f8] sm:$0xff] 0.0
        $region74: #{sam_adapter_forward.1} parent=65 // pred_fallthru
          _
        %v440 = vld [vmem:[#allocation2] sm:$0xff]
        %v441 = vld [vmem:[#allocation2 + $0x8] sm:$0xff]
        %v442 = vld [vmem:[#allocation2 + $0x10] sm:$0xff]
        %v443 = vld [vmem:[#allocation2 + $0x18] sm:$0xff]
        %v444 = vld [vmem:[#allocation2 + $0x20] sm:$0xff]
        %v445 = vld [vmem:[#allocation2 + $0x28] sm:$0xff]
        %v446 = vld [vmem:[#allocation2 + $0x30] sm:$0xff]
        %v447 = vld [vmem:[#allocation2 + $0x38] sm:$0xff]
        %v448 = vld [vmem:[#allocation2 + $0x40] sm:$0xff]
        %v449 = vld [vmem:[#allocation2 + $0x48] sm:$0xff]
        %v450 = vld [vmem:[#allocation2 + $0x50] sm:$0xff]
        %v451 = vld [vmem:[#allocation2 + $0x58] sm:$0xff]
        %v452 = vld [vmem:[#allocation2 + $0x60] sm:$0xff]
        %v453 = vld [vmem:[#allocation2 + $0x68] sm:$0xff]
        %v454 = vld [vmem:[#allocation2 + $0x70] sm:$0xff]
        %v455 = vld [vmem:[#allocation2 + $0x78] sm:$0xff]
        %v456 = vld [vmem:[#allocation2 + $0x80] sm:$0xff]
        %v457 = vld [vmem:[#allocation2 + $0x88] sm:$0xff]
        %v458 = vld [vmem:[#allocation2 + $0x90] sm:$0xff]
        %v459 = vld [vmem:[#allocation2 + $0x98] sm:$0xff]
        %v460 = vld [vmem:[#allocation2 + $0xa0] sm:$0xff]
        %v461 = vld [vmem:[#allocation2 + $0xa8] sm:$0xff]
        %v462 = vld [vmem:[#allocation2 + $0xb0] sm:$0xff]
        %v463 = vld [vmem:[#allocation2 + $0xb8] sm:$0xff]
        %v464 = vld [vmem:[#allocation2 + $0xc0] sm:$0xff]
        %v465 = vld [vmem:[#allocation2 + $0xc8] sm:$0xff]
        %v466 = vld [vmem:[#allocation2 + $0xd0] sm:$0xff]
        %v467 = vld [vmem:[#allocation2 + $0xd8] sm:$0xff]
        %v468 = vld [vmem:[#allocation2 + $0xe0] sm:$0xff]
        %v469 = vld [vmem:[#allocation2 + $0xe8] sm:$0xff]
        %v470 = vld [vmem:[#allocation2 + $0xf0] sm:$0xff]
        %v471 = vld [vmem:[#allocation2 + $0xf8] sm:$0xff]
        %v472 = vld [vmem:[#allocation2 + $0x100] sm:$0xff]
        %v473 = vld [vmem:[#allocation2 + $0x108] sm:$0xff]
        %v474 = vld [vmem:[#allocation2 + $0x110] sm:$0xff]
        %v475 = vld [vmem:[#allocation2 + $0x118] sm:$0xff]
        %v476 = vld [vmem:[#allocation2 + $0x120] sm:$0xff]
        %v477 = vld [vmem:[#allocation2 + $0x128] sm:$0xff]
        %v478 = vld [vmem:[#allocation2 + $0x130] sm:$0xff]
        %v479 = vld [vmem:[#allocation2 + $0x138] sm:$0xff]
        %v480 = vld [vmem:[#allocation2 + $0x140] sm:$0xff]
        %v481 = vld [vmem:[#allocation2 + $0x148] sm:$0xff]
        %v482 = vld [vmem:[#allocation2 + $0x150] sm:$0xff]
        %v483 = vld [vmem:[#allocation2 + $0x158] sm:$0xff]
        %v484 = vld [vmem:[#allocation2 + $0x160] sm:$0xff]
        %v485 = vld [vmem:[#allocation2 + $0x168] sm:$0xff]
        %v486 = vld [vmem:[#allocation2 + $0x170] sm:$0xff]
        %v487 = vld [vmem:[#allocation2 + $0x178] sm:$0xff]
        %v488 = vld [vmem:[#allocation2 + $0x180] sm:$0xff]
        %v489 = vld [vmem:[#allocation2 + $0x188] sm:$0xff]
        %v490 = vld [vmem:[#allocation2 + $0x190] sm:$0xff]
        %v491 = vld [vmem:[#allocation2 + $0x198] sm:$0xff]
        %v492 = vld [vmem:[#allocation2 + $0x1a0] sm:$0xff]
        %v493 = vld [vmem:[#allocation2 + $0x1a8] sm:$0xff]
        %v494 = vld [vmem:[#allocation2 + $0x1b0] sm:$0xff]
        %v495 = vld [vmem:[#allocation2 + $0x1b8] sm:$0xff]
        %v496 = vld [vmem:[#allocation2 + $0x1c0] sm:$0xff]
        %v497 = vld [vmem:[#allocation2 + $0x1c8] sm:$0xff]
        %v498 = vld [vmem:[#allocation2 + $0x1d0] sm:$0xff]
        %v499 = vld [vmem:[#allocation2 + $0x1d8] sm:$0xff]
        %v500 = vld [vmem:[#allocation2 + $0x1e0] sm:$0xff]
        %v501 = vld [vmem:[#allocation2 + $0x1e8] sm:$0xff]
        %v502 = vld [vmem:[#allocation2 + $0x1f0] sm:$0xff]
        %v503 = vld [vmem:[#allocation2 + $0x1f8] sm:$0xff]
        %v504 = vld [vmem:[%s332] sm:$0xff]
        %v505 = vld [vmem:[%s332 + $0x8] sm:$0xff]
        %v506 = vld [vmem:[%s332 + $0x10] sm:$0xff]
        %v507 = vld [vmem:[%s332 + $0x18] sm:$0xff]
        %v508 = vld [vmem:[%s332 + $0x20] sm:$0xff]
        %v509 = vld [vmem:[%s332 + $0x28] sm:$0xff]
        %v510 = vld [vmem:[%s332 + $0x30] sm:$0xff]
        %v511 = vld [vmem:[%s332 + $0x38] sm:$0xff]
        %v512 = vld [vmem:[%s332 + $0x40] sm:$0xff]
        %v513 = vld [vmem:[%s332 + $0x48] sm:$0xff]
        %v514 = vld [vmem:[%s332 + $0x50] sm:$0xff]
        %v515 = vld [vmem:[%s332 + $0x58] sm:$0xff]
        %v516 = vld [vmem:[%s332 + $0x60] sm:$0xff]
        %v517 = vld [vmem:[%s332 + $0x68] sm:$0xff]
        %v518 = vld [vmem:[%s332 + $0x70] sm:$0xff]
        %v519 = vld [vmem:[%s332 + $0x78] sm:$0xff]
        %v520 = vld [vmem:[%s332 + $0x80] sm:$0xff]
        %v521 = vld [vmem:[%s332 + $0x88] sm:$0xff]
        %v522 = vld [vmem:[%s332 + $0x90] sm:$0xff]
        %v523 = vld [vmem:[%s332 + $0x98] sm:$0xff]
        %v524 = vld [vmem:[%s332 + $0xa0] sm:$0xff]
        %v525 = vld [vmem:[%s332 + $0xa8] sm:$0xff]
        %v526 = vld [vmem:[%s332 + $0xb0] sm:$0xff]
        %v527 = vld [vmem:[%s332 + $0xb8] sm:$0xff]
        %v528 = vld [vmem:[%s332 + $0xc0] sm:$0xff]
        %v529 = vld [vmem:[%s332 + $0xc8] sm:$0xff]
        %v530 = vld [vmem:[%s332 + $0xd0] sm:$0xff]
        %v531 = vld [vmem:[%s332 + $0xd8] sm:$0xff]
        %v532 = vld [vmem:[%s332 + $0xe0] sm:$0xff]
        %v533 = vld [vmem:[%s332 + $0xe8] sm:$0xff]
        %v534 = vld [vmem:[%s332 + $0xf0] sm:$0xff]
        %v535 = vld [vmem:[%s332 + $0xf8] sm:$0xff]
        %v536 = vld [vmem:[%s365] sm:$0xff]
        %v537 = vld [vmem:[%s365 + $0x8] sm:$0xff]
        %v538 = vld [vmem:[%s365 + $0x10] sm:$0xff]
        %v539 = vld [vmem:[%s365 + $0x18] sm:$0xff]
        %v540 = vld [vmem:[%s365 + $0x20] sm:$0xff]
        %v541 = vld [vmem:[%s365 + $0x28] sm:$0xff]
        %v542 = vld [vmem:[%s365 + $0x30] sm:$0xff]
        %v543 = vld [vmem:[%s365 + $0x38] sm:$0xff]
        %v544 = vld [vmem:[%s365 + $0x40] sm:$0xff]
        %v545 = vld [vmem:[%s365 + $0x48] sm:$0xff]
        %v546 = vld [vmem:[%s365 + $0x50] sm:$0xff]
        %v547 = vld [vmem:[%s365 + $0x58] sm:$0xff]
        %v548 = vld [vmem:[%s365 + $0x60] sm:$0xff]
        %v549 = vld [vmem:[%s365 + $0x68] sm:$0xff]
        %v550 = vld [vmem:[%s365 + $0x70] sm:$0xff]
        %v551 = vld [vmem:[%s365 + $0x78] sm:$0xff]
        %v552 = vld [vmem:[%s365 + $0x80] sm:$0xff]
        %v553 = vld [vmem:[%s365 + $0x88] sm:$0xff]
        %v554 = vld [vmem:[%s365 + $0x90] sm:$0xff]
        %v555 = vld [vmem:[%s365 + $0x98] sm:$0xff]
        %v556 = vld [vmem:[%s365 + $0xa0] sm:$0xff]
        %v557 = vld [vmem:[%s365 + $0xa8] sm:$0xff]
        %v558 = vld [vmem:[%s365 + $0xb0] sm:$0xff]
        %v559 = vld [vmem:[%s365 + $0xb8] sm:$0xff]
        %v560 = vld [vmem:[%s365 + $0xc0] sm:$0xff]
        %v561 = vld [vmem:[%s365 + $0xc8] sm:$0xff]
        %v562 = vld [vmem:[%s365 + $0xd0] sm:$0xff]
        %v563 = vld [vmem:[%s365 + $0xd8] sm:$0xff]
        %v564 = vld [vmem:[%s365 + $0xe0] sm:$0xff]
        %v565 = vld [vmem:[%s365 + $0xe8] sm:$0xff]
        %v566 = vld [vmem:[%s365 + $0xf0] sm:$0xff]
        %v567 = vld [vmem:[%s365 + $0xf8] sm:$0xff]
        %v600 = vunpack.c.l.b16 %v504
        %v601 = vunpack.c.h.b16 %v504
        %v602 = vunpack.c.l.b16 %v505
        %v603 = vunpack.c.h.b16 %v505
        %v604 = vunpack.c.l.b16 %v506
        %v605 = vunpack.c.h.b16 %v506
        %v606 = vunpack.c.l.b16 %v507
        %v607 = vunpack.c.h.b16 %v507
        %v608 = vunpack.c.l.b16 %v508
        %v609 = vunpack.c.h.b16 %v508
        %v610 = vunpack.c.l.b16 %v509
        %v611 = vunpack.c.h.b16 %v509
        %v612 = vunpack.c.l.b16 %v510
        %v613 = vunpack.c.h.b16 %v510
        %v614 = vunpack.c.l.b16 %v511
        %v615 = vunpack.c.h.b16 %v511
        %v616 = vunpack.c.l.b16 %v512
        %v617 = vunpack.c.h.b16 %v512
        %v618 = vunpack.c.l.b16 %v513
        %v619 = vunpack.c.h.b16 %v513
        %v620 = vunpack.c.l.b16 %v514
        %v621 = vunpack.c.h.b16 %v514
        %v622 = vunpack.c.l.b16 %v515
        %v623 = vunpack.c.h.b16 %v515
        %v624 = vunpack.c.l.b16 %v516
        %v625 = vunpack.c.h.b16 %v516
        %v626 = vunpack.c.l.b16 %v517
        %v627 = vunpack.c.h.b16 %v517
        %v628 = vunpack.c.l.b16 %v518
        %v629 = vunpack.c.h.b16 %v518
        %v630 = vunpack.c.l.b16 %v519
        %v631 = vunpack.c.h.b16 %v519
        %v632 = vunpack.c.l.b16 %v520
        %v633 = vunpack.c.h.b16 %v520
        %v634 = vunpack.c.l.b16 %v521
        %v635 = vunpack.c.h.b16 %v521
        %v636 = vunpack.c.l.b16 %v522
        %v637 = vunpack.c.h.b16 %v522
        %v638 = vunpack.c.l.b16 %v523
        %v639 = vunpack.c.h.b16 %v523
        %v640 = vunpack.c.l.b16 %v524
        %v641 = vunpack.c.h.b16 %v524
        %v642 = vunpack.c.l.b16 %v525
        %v643 = vunpack.c.h.b16 %v525
        %v644 = vunpack.c.l.b16 %v526
        %v645 = vunpack.c.h.b16 %v526
        %v646 = vunpack.c.l.b16 %v527
        %v647 = vunpack.c.h.b16 %v527
        %v648 = vunpack.c.l.b16 %v528
        %v649 = vunpack.c.h.b16 %v528
        %v650 = vunpack.c.l.b16 %v529
        %v651 = vunpack.c.h.b16 %v529
        %v652 = vunpack.c.l.b16 %v530
        %v653 = vunpack.c.h.b16 %v530
        %v654 = vunpack.c.l.b16 %v531
        %v655 = vunpack.c.h.b16 %v531
        %v656 = vunpack.c.l.b16 %v532
        %v657 = vunpack.c.h.b16 %v532
        %v658 = vunpack.c.l.b16 %v533
        %v659 = vunpack.c.h.b16 %v533
        %v660 = vunpack.c.l.b16 %v534
        %v661 = vunpack.c.h.b16 %v534
        %v662 = vunpack.c.l.b16 %v535
        %v663 = vunpack.c.h.b16 %v535
        %v664 = vpack.c.b16 %v602, %v600
        %v665 = vpack.c.b16 %v603, %v601
        %v666 = vpack.c.b16 %v606, %v604
        %v667 = vpack.c.b16 %v607, %v605
        %v668 = vpack.c.b16 %v610, %v608
        %v669 = vpack.c.b16 %v611, %v609
        %v670 = vpack.c.b16 %v614, %v612
        %v671 = vpack.c.b16 %v615, %v613
        %v672 = vpack.c.b16 %v618, %v616
        %v673 = vpack.c.b16 %v619, %v617
        %v674 = vpack.c.b16 %v622, %v620
        %v675 = vpack.c.b16 %v623, %v621
        %v676 = vpack.c.b16 %v626, %v624
        %v677 = vpack.c.b16 %v627, %v625
        %v678 = vpack.c.b16 %v630, %v628
        %v679 = vpack.c.b16 %v631, %v629
        %v680 = vpack.c.b16 %v634, %v632
        %v681 = vpack.c.b16 %v635, %v633
        %v682 = vpack.c.b16 %v638, %v636
        %v683 = vpack.c.b16 %v639, %v637
        %v684 = vpack.c.b16 %v642, %v640
        %v685 = vpack.c.b16 %v643, %v641
        %v686 = vpack.c.b16 %v646, %v644
        %v687 = vpack.c.b16 %v647, %v645
        %v688 = vpack.c.b16 %v650, %v648
        %v689 = vpack.c.b16 %v651, %v649
        %v690 = vpack.c.b16 %v654, %v652
        %v691 = vpack.c.b16 %v655, %v653
        %v692 = vpack.c.b16 %v658, %v656
        %v693 = vpack.c.b16 %v659, %v657
        %v694 = vpack.c.b16 %v662, %v660
        %v695 = vpack.c.b16 %v663, %v661
        %v760 = vunpack.c.l.b16 %v536
        %v761 = vunpack.c.h.b16 %v536
        %v762 = vunpack.c.l.b16 %v537
        %v763 = vunpack.c.h.b16 %v537
        %v764 = vunpack.c.l.b16 %v538
        %v765 = vunpack.c.h.b16 %v538
        %v766 = vunpack.c.l.b16 %v539
        %v767 = vunpack.c.h.b16 %v539
        %v768 = vunpack.c.l.b16 %v540
        %v769 = vunpack.c.h.b16 %v540
        %v770 = vunpack.c.l.b16 %v541
        %v771 = vunpack.c.h.b16 %v541
        %v772 = vunpack.c.l.b16 %v542
        %v773 = vunpack.c.h.b16 %v542
        %v774 = vunpack.c.l.b16 %v543
        %v775 = vunpack.c.h.b16 %v543
        %v776 = vunpack.c.l.b16 %v544
        %v777 = vunpack.c.h.b16 %v544
        %v778 = vunpack.c.l.b16 %v545
        %v779 = vunpack.c.h.b16 %v545
        %v780 = vunpack.c.l.b16 %v546
        %v781 = vunpack.c.h.b16 %v546
        %v782 = vunpack.c.l.b16 %v547
        %v783 = vunpack.c.h.b16 %v547
        %v784 = vunpack.c.l.b16 %v548
        %v785 = vunpack.c.h.b16 %v548
        %v786 = vunpack.c.l.b16 %v549
        %v787 = vunpack.c.h.b16 %v549
        %v788 = vunpack.c.l.b16 %v550
        %v789 = vunpack.c.h.b16 %v550
        %v790 = vunpack.c.l.b16 %v551
        %v791 = vunpack.c.h.b16 %v551
        %v792 = vunpack.c.l.b16 %v552
        %v793 = vunpack.c.h.b16 %v552
        %v794 = vunpack.c.l.b16 %v553
        %v795 = vunpack.c.h.b16 %v553
        %v796 = vunpack.c.l.b16 %v554
        %v797 = vunpack.c.h.b16 %v554
        %v798 = vunpack.c.l.b16 %v555
        %v799 = vunpack.c.h.b16 %v555
        %v800 = vunpack.c.l.b16 %v556
        %v801 = vunpack.c.h.b16 %v556
        %v802 = vunpack.c.l.b16 %v557
        %v803 = vunpack.c.h.b16 %v557
        %v804 = vunpack.c.l.b16 %v558
        %v805 = vunpack.c.h.b16 %v558
        %v806 = vunpack.c.l.b16 %v559
        %v807 = vunpack.c.h.b16 %v559
        %v808 = vunpack.c.l.b16 %v560
        %v809 = vunpack.c.h.b16 %v560
        %v810 = vunpack.c.l.b16 %v561
        %v811 = vunpack.c.h.b16 %v561
        %v812 = vunpack.c.l.b16 %v562
        %v813 = vunpack.c.h.b16 %v562
        %v814 = vunpack.c.l.b16 %v563
        %v815 = vunpack.c.h.b16 %v563
        %v816 = vunpack.c.l.b16 %v564
        %v817 = vunpack.c.h.b16 %v564
        %v818 = vunpack.c.l.b16 %v565
        %v819 = vunpack.c.h.b16 %v565
        %v820 = vunpack.c.l.b16 %v566
        %v821 = vunpack.c.h.b16 %v566
        %v822 = vunpack.c.l.b16 %v567
        %v823 = vunpack.c.h.b16 %v567
        %v824 = vpack.c.b16 %v762, %v760
        %v825 = vpack.c.b16 %v763, %v761
        %v826 = vpack.c.b16 %v766, %v764
        %v827 = vpack.c.b16 %v767, %v765
        %v828 = vpack.c.b16 %v770, %v768
        %v829 = vpack.c.b16 %v771, %v769
        %v830 = vpack.c.b16 %v774, %v772
        %v831 = vpack.c.b16 %v775, %v773
        %v832 = vpack.c.b16 %v778, %v776
        %v833 = vpack.c.b16 %v779, %v777
        %v834 = vpack.c.b16 %v782, %v780
        %v835 = vpack.c.b16 %v783, %v781
        %v836 = vpack.c.b16 %v786, %v784
        %v837 = vpack.c.b16 %v787, %v785
        %v838 = vpack.c.b16 %v790, %v788
        %v839 = vpack.c.b16 %v791, %v789
        %v840 = vpack.c.b16 %v794, %v792
        %v841 = vpack.c.b16 %v795, %v793
        %v842 = vpack.c.b16 %v798, %v796
        %v843 = vpack.c.b16 %v799, %v797
        %v844 = vpack.c.b16 %v802, %v800
        %v845 = vpack.c.b16 %v803, %v801
        %v846 = vpack.c.b16 %v806, %v804
        %v847 = vpack.c.b16 %v807, %v805
        %v848 = vpack.c.b16 %v810, %v808
        %v849 = vpack.c.b16 %v811, %v809
        %v850 = vpack.c.b16 %v814, %v812
        %v851 = vpack.c.b16 %v815, %v813
        %v852 = vpack.c.b16 %v818, %v816
        %v853 = vpack.c.b16 %v819, %v817
        %v854 = vpack.c.b16 %v822, %v820
        %v855 = vpack.c.b16 %v823, %v821
        %888 = vmatprep.subr.bf16.mxu0 %v825
        %889 = vmatpush1.bf16.msra.mxu0 %v824
        %890 = vmatprep.subr.bf16.mxu0 %v827
        %891 = vmatpush1.bf16.msra.mxu0 %v826
        %892 = vmatprep.subr.bf16.mxu0 %v829
        %893 = vmatpush1.bf16.msra.mxu0 %v828
        %894 = vmatprep.subr.bf16.mxu0 %v831
        %895 = vmatpush1.bf16.msra.mxu0 %v830
        %896 = vmatprep.subr.bf16.mxu0 %v833
        %897 = vmatpush1.bf16.msra.mxu0 %v832
        %898 = vmatprep.subr.bf16.mxu0 %v835
        %899 = vmatpush1.bf16.msra.mxu0 %v834
        %900 = vmatprep.subr.bf16.mxu0 %v837
        %901 = vmatpush1.bf16.msra.mxu0 %v836
        %902 = vmatprep.subr.bf16.mxu0 %v839
        %903 = vmatpush1.bf16.msra.mxu0 %v838
        %904 = vmatprep.subr.bf16.mxu0 %v841
        %905 = vmatpush1.bf16.msra.mxu0 %v840
        %906 = vmatprep.subr.bf16.mxu0 %v843
        %907 = vmatpush1.bf16.msra.mxu0 %v842
        %908 = vmatprep.subr.bf16.mxu0 %v845
        %909 = vmatpush1.bf16.msra.mxu0 %v844
        %910 = vmatprep.subr.bf16.mxu0 %v847
        %911 = vmatpush1.bf16.msra.mxu0 %v846
        %912 = vmatprep.subr.bf16.mxu0 %v849
        %913 = vmatpush1.bf16.msra.mxu0 %v848
        %914 = vmatprep.subr.bf16.mxu0 %v851
        %915 = vmatpush1.bf16.msra.mxu0 %v850
        %916 = vmatprep.subr.bf16.mxu0 %v853
        %917 = vmatpush1.bf16.msra.mxu0 %v852
        %918 = vmatprep.subr.bf16.mxu0 %v855
        %919 = vmatpush1.bf16.msra.mxu0 %v854
        %920 = vmatprep.mubr.bf16.mxu0 %v665
        %921 = vmatmul.mubr.bf16.gmra.mrb[0].mxu0 %v664
        %v922 = vpop.f32.mrb[0].mxu0
        %v923 = vadd.f32 0.0, %v922
        %v924 = vpop.f32.mrb[0].mxu0
        %v925 = vadd.f32 0.0, %v924
        %v926 = vpop.f32.mrb[0].mxu0
        %v927 = vadd.f32 0.0, %v926
        %v928 = vpop.f32.mrb[0].mxu0
        %v929 = vadd.f32 0.0, %v928
        %930 = vmatprep.mubr.bf16.mxu0 %v667
        %931 = vmatmul.mubr.bf16.gmra.mrb[0].mxu0 %v666
        %v932 = vpop.f32.mrb[0].mxu0
        %v933 = vadd.f32 0.0, %v932
        %v934 = vpop.f32.mrb[0].mxu0
        %v935 = vadd.f32 0.0, %v934
        %v936 = vpop.f32.mrb[0].mxu0
        %v937 = vadd.f32 0.0, %v936
        %v938 = vpop.f32.mrb[0].mxu0
        %v939 = vadd.f32 0.0, %v938
        %940 = vmatprep.mubr.bf16.mxu0 %v669
        %941 = vmatmul.mubr.bf16.gmra.mrb[0].mxu0 %v668
        %v942 = vpop.f32.mrb[0].mxu0
        %v943 = vadd.f32 0.0, %v942
        %v944 = vpop.f32.mrb[0].mxu0
        %v945 = vadd.f32 0.0, %v944
        %v946 = vpop.f32.mrb[0].mxu0
        %v947 = vadd.f32 0.0, %v946
        %v948 = vpop.f32.mrb[0].mxu0
        %v949 = vadd.f32 0.0, %v948
        %950 = vmatprep.mubr.bf16.mxu0 %v671
        %951 = vmatmul.mubr.bf16.gmra.mrb[0].mxu0 %v670
        %v952 = vpop.f32.mrb[0].mxu0
        %v953 = vadd.f32 0.0, %v952
        %v954 = vpop.f32.mrb[0].mxu0
        %v955 = vadd.f32 0.0, %v954
        %v956 = vpop.f32.mrb[0].mxu0
        %v957 = vadd.f32 0.0, %v956
        %v958 = vpop.f32.mrb[0].mxu0
        %v959 = vadd.f32 0.0, %v958
        %960 = vmatprep.mubr.bf16.mxu0 %v673
        %961 = vmatmul.mubr.bf16.gmra.mrb[0].mxu0 %v672
        %v962 = vpop.f32.mrb[0].mxu0
        %v963 = vadd.f32 0.0, %v962
        %v964 = vpop.f32.mrb[0].mxu0
        %v965 = vadd.f32 0.0, %v964
        %v966 = vpop.f32.mrb[0].mxu0
        %v967 = vadd.f32 0.0, %v966
        %v968 = vpop.f32.mrb[0].mxu0
        %v969 = vadd.f32 0.0, %v968
        %970 = vmatprep.mubr.bf16.mxu0 %v675
        %971 = vmatmul.mubr.bf16.gmra.mrb[0].mxu0 %v674
        %v972 = vpop.f32.mrb[0].mxu0
        %v973 = vadd.f32 0.0, %v972
        %v974 = vpop.f32.mrb[0].mxu0
        %v975 = vadd.f32 0.0, %v974
        %v976 = vpop.f32.mrb[0].mxu0
        %v977 = vadd.f32 0.0, %v976
        %v978 = vpop.f32.mrb[0].mxu0
        %v979 = vadd.f32 0.0, %v978
        %980 = vmatprep.mubr.bf16.mxu0 %v677
        %981 = vmatmul.mubr.bf16.gmra.mrb[0].mxu0 %v676
        %v982 = vpop.f32.mrb[0].mxu0
        %v983 = vadd.f32 0.0, %v982
        %v984 = vpop.f32.mrb[0].mxu0
        %v985 = vadd.f32 0.0, %v984
        %v986 = vpop.f32.mrb[0].mxu0
        %v987 = vadd.f32 0.0, %v986
        %v988 = vpop.f32.mrb[0].mxu0
        %v989 = vadd.f32 0.0, %v988
        %990 = vmatprep.mubr.bf16.mxu0 %v679
        %991 = vmatmul.mubr.bf16.gmra.mrb[0].mxu0 %v678
        %v992 = vpop.f32.mrb[0].mxu0
        %v993 = vadd.f32 0.0, %v992
        %v994 = vpop.f32.mrb[0].mxu0
        %v995 = vadd.f32 0.0, %v994
        %v996 = vpop.f32.mrb[0].mxu0
        %v997 = vadd.f32 0.0, %v996
        %v998 = vpop.f32.mrb[0].mxu0
        %v999 = vadd.f32 0.0, %v998
        %1000 = vmatprep.mubr.bf16.mxu0 %v681
        %1001 = vmatmul.mubr.bf16.gmra.mrb[0].mxu0 %v680
        %v1002 = vpop.f32.mrb[0].mxu0
        %v1003 = vadd.f32 0.0, %v1002
        %v1004 = vpop.f32.mrb[0].mxu0
        %v1005 = vadd.f32 0.0, %v1004
        %v1006 = vpop.f32.mrb[0].mxu0
        %v1007 = vadd.f32 0.0, %v1006
        %v1008 = vpop.f32.mrb[0].mxu0
        %v1009 = vadd.f32 0.0, %v1008
        %1010 = vmatprep.mubr.bf16.mxu0 %v683
        %1011 = vmatmul.mubr.bf16.gmra.mrb[0].mxu0 %v682
        %v1012 = vpop.f32.mrb[0].mxu0
        %v1013 = vadd.f32 0.0, %v1012
        %v1014 = vpop.f32.mrb[0].mxu0
        %v1015 = vadd.f32 0.0, %v1014
        %v1016 = vpop.f32.mrb[0].mxu0
        %v1017 = vadd.f32 0.0, %v1016
        %v1018 = vpop.f32.mrb[0].mxu0
        %v1019 = vadd.f32 0.0, %v1018
        %1020 = vmatprep.mubr.bf16.mxu0 %v685
        %1021 = vmatmul.mubr.bf16.gmra.mrb[0].mxu0 %v684
        %v1022 = vpop.f32.mrb[0].mxu0
        %v1023 = vadd.f32 0.0, %v1022
        %v1024 = vpop.f32.mrb[0].mxu0
        %v1025 = vadd.f32 0.0, %v1024
        %v1026 = vpop.f32.mrb[0].mxu0
        %v1027 = vadd.f32 0.0, %v1026
        %v1028 = vpop.f32.mrb[0].mxu0
        %v1029 = vadd.f32 0.0, %v1028
        %1030 = vmatprep.mubr.bf16.mxu0 %v687
        %1031 = vmatmul.mubr.bf16.gmra.mrb[0].mxu0 %v686
        %v1032 = vpop.f32.mrb[0].mxu0
        %v1033 = vadd.f32 0.0, %v1032
        %v1034 = vpop.f32.mrb[0].mxu0
        %v1035 = vadd.f32 0.0, %v1034
        %v1036 = vpop.f32.mrb[0].mxu0
        %v1037 = vadd.f32 0.0, %v1036
        %v1038 = vpop.f32.mrb[0].mxu0
        %v1039 = vadd.f32 0.0, %v1038
        %1040 = vmatprep.mubr.bf16.mxu0 %v689
        %1041 = vmatmul.mubr.bf16.gmra.mrb[0].mxu0 %v688
        %v1042 = vpop.f32.mrb[0].mxu0
        %v1043 = vadd.f32 0.0, %v1042
        %v1044 = vpop.f32.mrb[0].mxu0
        %v1045 = vadd.f32 0.0, %v1044
        %v1046 = vpop.f32.mrb[0].mxu0
        %v1047 = vadd.f32 0.0, %v1046
        %v1048 = vpop.f32.mrb[0].mxu0
        %v1049 = vadd.f32 0.0, %v1048
        %1050 = vmatprep.mubr.bf16.mxu0 %v691
        %1051 = vmatmul.mubr.bf16.gmra.mrb[0].mxu0 %v690
        %v1052 = vpop.f32.mrb[0].mxu0
        %v1053 = vadd.f32 0.0, %v1052
        %v1054 = vpop.f32.mrb[0].mxu0
        %v1055 = vadd.f32 0.0, %v1054
        %v1056 = vpop.f32.mrb[0].mxu0
        %v1057 = vadd.f32 0.0, %v1056
        %v1058 = vpop.f32.mrb[0].mxu0
        %v1059 = vadd.f32 0.0, %v1058
        %1060 = vmatprep.mubr.bf16.mxu0 %v693
        %1061 = vmatmul.mubr.bf16.gmra.mrb[0].mxu0 %v692
        %v1062 = vpop.f32.mrb[0].mxu0
        %v1063 = vadd.f32 0.0, %v1062
        %v1064 = vpop.f32.mrb[0].mxu0
        %v1065 = vadd.f32 0.0, %v1064
        %v1066 = vpop.f32.mrb[0].mxu0
        %v1067 = vadd.f32 0.0, %v1066
        %v1068 = vpop.f32.mrb[0].mxu0
        %v1069 = vadd.f32 0.0, %v1068
        %1070 = vmatprep.mubr.bf16.mxu0 %v695
        %1071 = vmatmul.mubr.bf16.gmra.mrb[0].mxu0 %v694
        %v1072 = vpop.f32.mrb[0].mxu0
        %v1073 = vadd.f32 0.0, %v1072
        %v1074 = vpop.f32.mrb[0].mxu0
        %v1075 = vadd.f32 0.0, %v1074
        %v1076 = vpop.f32.mrb[0].mxu0
        %v1077 = vadd.f32 0.0, %v1076
        %v1078 = vpop.f32.mrb[0].mxu0
        %v1079 = vadd.f32 0.0, %v1078
        %1080 = vdwg.mxu0
        %v1081 = vadd.f32 %v440, %v923
        %v1082 = vadd.f32 %v441, %v925
        %v1083 = vadd.f32 %v442, %v927
        %v1084 = vadd.f32 %v443, %v929
        %v1085 = vadd.f32 %v444, %v933
        %v1086 = vadd.f32 %v445, %v935
        %v1087 = vadd.f32 %v446, %v937
        %v1088 = vadd.f32 %v447, %v939
        %v1089 = vadd.f32 %v448, %v943
        %v1090 = vadd.f32 %v449, %v945
        %v1091 = vadd.f32 %v450, %v947
        %v1092 = vadd.f32 %v451, %v949
        %v1093 = vadd.f32 %v452, %v953
        %v1094 = vadd.f32 %v453, %v955
        %v1095 = vadd.f32 %v454, %v957
        %v1096 = vadd.f32 %v455, %v959
        %v1097 = vadd.f32 %v456, %v963
        %v1098 = vadd.f32 %v457, %v965
        %v1099 = vadd.f32 %v458, %v967
        %v1100 = vadd.f32 %v459, %v969
        %v1101 = vadd.f32 %v460, %v973
        %v1102 = vadd.f32 %v461, %v975
        %v1103 = vadd.f32 %v462, %v977
        %v1104 = vadd.f32 %v463, %v979
        %v1105 = vadd.f32 %v464, %v983
        %v1106 = vadd.f32 %v465, %v985
        %v1107 = vadd.f32 %v466, %v987
        %v1108 = vadd.f32 %v467, %v989
        %v1109 = vadd.f32 %v468, %v993
        %v1110 = vadd.f32 %v469, %v995
        %v1111 = vadd.f32 %v470, %v997
        %v1112 = vadd.f32 %v471, %v999
        %v1113 = vadd.f32 %v472, %v1003
        %v1114 = vadd.f32 %v473, %v1005
        %v1115 = vadd.f32 %v474, %v1007
        %v1116 = vadd.f32 %v475, %v1009
        %v1117 = vadd.f32 %v476, %v1013
        %v1118 = vadd.f32 %v477, %v1015
        %v1119 = vadd.f32 %v478, %v1017
        %v1120 = vadd.f32 %v479, %v1019
        %v1121 = vadd.f32 %v480, %v1023
        %v1122 = vadd.f32 %v481, %v1025
        %v1123 = vadd.f32 %v482, %v1027
        %v1124 = vadd.f32 %v483, %v1029
        %v1125 = vadd.f32 %v484, %v1033
        %v1126 = vadd.f32 %v485, %v1035
        %v1127 = vadd.f32 %v486, %v1037
        %v1128 = vadd.f32 %v487, %v1039
        %v1129 = vadd.f32 %v488, %v1043
        %v1130 = vadd.f32 %v489, %v1045
        %v1131 = vadd.f32 %v490, %v1047
        %v1132 = vadd.f32 %v491, %v1049
        %v1133 = vadd.f32 %v492, %v1053
        %v1134 = vadd.f32 %v493, %v1055
        %v1135 = vadd.f32 %v494, %v1057
        %v1136 = vadd.f32 %v495, %v1059
        %v1137 = vadd.f32 %v496, %v1063
        %v1138 = vadd.f32 %v497, %v1065
        %v1139 = vadd.f32 %v498, %v1067
        %v1140 = vadd.f32 %v499, %v1069
        %v1141 = vadd.f32 %v500, %v1073
        %v1142 = vadd.f32 %v501, %v1075
        %v1143 = vadd.f32 %v502, %v1077
        %v1144 = vadd.f32 %v503, %v1079
        %1145 = vst [vmem:[#allocation2] sm:$0xff] %v1081
        %1146 = vst [vmem:[#allocation2 + $0x8] sm:$0xff] %v1082
        %1147 = vst [vmem:[#allocation2 + $0x10] sm:$0xff] %v1083
        %1148 = vst [vmem:[#allocation2 + $0x18] sm:$0xff] %v1084
        %1149 = vst [vmem:[#allocation2 + $0x20] sm:$0xff] %v1085
        %1150 = vst [vmem:[#allocation2 + $0x28] sm:$0xff] %v1086
        %1151 = vst [vmem:[#allocation2 + $0x30] sm:$0xff] %v1087
        %1152 = vst [vmem:[#allocation2 + $0x38] sm:$0xff] %v1088
        %1153 = vst [vmem:[#allocation2 + $0x40] sm:$0xff] %v1089
        %1154 = vst [vmem:[#allocation2 + $0x48] sm:$0xff] %v1090
        %1155 = vst [vmem:[#allocation2 + $0x50] sm:$0xff] %v1091
        %1156 = vst [vmem:[#allocation2 + $0x58] sm:$0xff] %v1092
        %1157 = vst [vmem:[#allocation2 + $0x60] sm:$0xff] %v1093
        %1158 = vst [vmem:[#allocation2 + $0x68] sm:$0xff] %v1094
        %1159 = vst [vmem:[#allocation2 + $0x70] sm:$0xff] %v1095
        %1160 = vst [vmem:[#allocation2 + $0x78] sm:$0xff] %v1096
        %1161 = vst [vmem:[#allocation2 + $0x80] sm:$0xff] %v1097
        %1162 = vst [vmem:[#allocation2 + $0x88] sm:$0xff] %v1098
        %1163 = vst [vmem:[#allocation2 + $0x90] sm:$0xff] %v1099
        %1164 = vst [vmem:[#allocation2 + $0x98] sm:$0xff] %v1100
        %1165 = vst [vmem:[#allocation2 + $0xa0] sm:$0xff] %v1101
        %1166 = vst [vmem:[#allocation2 + $0xa8] sm:$0xff] %v1102
        %1167 = vst [vmem:[#allocation2 + $0xb0] sm:$0xff] %v1103
        %1168 = vst [vmem:[#allocation2 + $0xb8] sm:$0xff] %v1104
        %1169 = vst [vmem:[#allocation2 + $0xc0] sm:$0xff] %v1105
        %1170 = vst [vmem:[#allocation2 + $0xc8] sm:$0xff] %v1106
        %1171 = vst [vmem:[#allocation2 + $0xd0] sm:$0xff] %v1107
        %1172 = vst [vmem:[#allocation2 + $0xd8] sm:$0xff] %v1108
        %1173 = vst [vmem:[#allocation2 + $0xe0] sm:$0xff] %v1109
        %1174 = vst [vmem:[#allocation2 + $0xe8] sm:$0xff] %v1110
        %1175 = vst [vmem:[#allocation2 + $0xf0] sm:$0xff] %v1111
        %1176 = vst [vmem:[#allocation2 + $0xf8] sm:$0xff] %v1112
        %1177 = vst [vmem:[#allocation2 + $0x100] sm:$0xff] %v1113
        %1178 = vst [vmem:[#allocation2 + $0x108] sm:$0xff] %v1114
        %1179 = vst [vmem:[#allocation2 + $0x110] sm:$0xff] %v1115
        %1180 = vst [vmem:[#allocation2 + $0x118] sm:$0xff] %v1116
        %1181 = vst [vmem:[#allocation2 + $0x120] sm:$0xff] %v1117
        %1182 = vst [vmem:[#allocation2 + $0x128] sm:$0xff] %v1118
        %1183 = vst [vmem:[#allocation2 + $0x130] sm:$0xff] %v1119
        %1184 = vst [vmem:[#allocation2 + $0x138] sm:$0xff] %v1120
        %1185 = vst [vmem:[#allocation2 + $0x140] sm:$0xff] %v1121
        %1186 = vst [vmem:[#allocation2 + $0x148] sm:$0xff] %v1122
        %1187 = vst [vmem:[#allocation2 + $0x150] sm:$0xff] %v1123
        %1188 = vst [vmem:[#allocation2 + $0x158] sm:$0xff] %v1124
        %1189 = vst [vmem:[#allocation2 + $0x160] sm:$0xff] %v1125
        %1190 = vst [vmem:[#allocation2 + $0x168] sm:$0xff] %v1126
        %1191 = vst [vmem:[#allocation2 + $0x170] sm:$0xff] %v1127
        %1192 = vst [vmem:[#allocation2 + $0x178] sm:$0xff] %v1128
        %1193 = vst [vmem:[#allocation2 + $0x180] sm:$0xff] %v1129
        %1194 = vst [vmem:[#allocation2 + $0x188] sm:$0xff] %v1130
        %1195 = vst [vmem:[#allocation2 + $0x190] sm:$0xff] %v1131
        %1196 = vst [vmem:[#allocation2 + $0x198] sm:$0xff] %v1132
        %1197 = vst [vmem:[#allocation2 + $0x1a0] sm:$0xff] %v1133
        %1198 = vst [vmem:[#allocation2 + $0x1a8] sm:$0xff] %v1134
        %1199 = vst [vmem:[#allocation2 + $0x1b0] sm:$0xff] %v1135
        %1200 = vst [vmem:[#allocation2 + $0x1b8] sm:$0xff] %v1136
        %1201 = vst [vmem:[#allocation2 + $0x1c0] sm:$0xff] %v1137
        %1202 = vst [vmem:[#allocation2 + $0x1c8] sm:$0xff] %v1138
        %1203 = vst [vmem:[#allocation2 + $0x1d0] sm:$0xff] %v1139
        %1204 = vst [vmem:[#allocation2 + $0x1d8] sm:$0xff] %v1140
        %1205 = vst [vmem:[#allocation2 + $0x1e0] sm:$0xff] %v1141
        %1206 = vst [vmem:[#allocation2 + $0x1e8] sm:$0xff] %v1142
        %1207 = vst [vmem:[#allocation2 + $0x1f0] sm:$0xff] %v1143
        %1208 = vst [vmem:[#allocation2 + $0x1f8] sm:$0xff] %v1144
        %p1209 = scmp.eq.s32.totalorder %s19, 4
        // Predicated region
        $region75: #{sam_adapter_forward.1} parent=65 // pred_check
          %p1210 = pneg %p1209
        $region76: #{sam_adapter_forward.1} parent=65 // pred_check_branch
          %1212 = sbr.rel (%p1210) target = $region78
        $region77: #{sam_adapter_forward.1} parent=65 // pred_region
          %v1213 = vld [vmem:[#allocation2] sm:$0xff]
          %v1214 = vld [vmem:[#allocation2 + $0x8] sm:$0xff]
          %v1215 = vld [vmem:[#allocation2 + $0x10] sm:$0xff]
          %v1216 = vld [vmem:[#allocation2 + $0x18] sm:$0xff]
          %v1217 = vld [vmem:[#allocation2 + $0x20] sm:$0xff]
          %v1218 = vld [vmem:[#allocation2 + $0x28] sm:$0xff]
          %v1219 = vld [vmem:[#allocation2 + $0x30] sm:$0xff]
          %v1220 = vld [vmem:[#allocation2 + $0x38] sm:$0xff]
          %v1221 = vld [vmem:[#allocation2 + $0x40] sm:$0xff]
          %v1222 = vld [vmem:[#allocation2 + $0x48] sm:$0xff]
          %v1223 = vld [vmem:[#allocation2 + $0x50] sm:$0xff]
          %v1224 = vld [vmem:[#allocation2 + $0x58] sm:$0xff]
          %v1225 = vld [vmem:[#allocation2 + $0x60] sm:$0xff]
          %v1226 = vld [vmem:[#allocation2 + $0x68] sm:$0xff]
          %v1227 = vld [vmem:[#allocation2 + $0x70] sm:$0xff]
          %v1228 = vld [vmem:[#allocation2 + $0x78] sm:$0xff]
          %v1229 = vld [vmem:[#allocation2 + $0x80] sm:$0xff]
          %v1230 = vld [vmem:[#allocation2 + $0x88] sm:$0xff]
          %v1231 = vld [vmem:[#allocation2 + $0x90] sm:$0xff]
          %v1232 = vld [vmem:[#allocation2 + $0x98] sm:$0xff]
          %v1233 = vld [vmem:[#allocation2 + $0xa0] sm:$0xff]
          %v1234 = vld [vmem:[#allocation2 + $0xa8] sm:$0xff]
          %v1235 = vld [vmem:[#allocation2 + $0xb0] sm:$0xff]
          %v1236 = vld [vmem:[#allocation2 + $0xb8] sm:$0xff]
          %v1237 = vld [vmem:[#allocation2 + $0xc0] sm:$0xff]
          %v1238 = vld [vmem:[#allocation2 + $0xc8] sm:$0xff]
          %v1239 = vld [vmem:[#allocation2 + $0xd0] sm:$0xff]
          %v1240 = vld [vmem:[#allocation2 + $0xd8] sm:$0xff]
          %v1241 = vld [vmem:[#allocation2 + $0xe0] sm:$0xff]
          %v1242 = vld [vmem:[#allocation2 + $0xe8] sm:$0xff]
          %v1243 = vld [vmem:[#allocation2 + $0xf0] sm:$0xff]
          %v1244 = vld [vmem:[#allocation2 + $0xf8] sm:$0xff]
          %v1245 = vld [vmem:[#allocation2 + $0x100] sm:$0xff]
          %v1246 = vld [vmem:[#allocation2 + $0x108] sm:$0xff]
          %v1247 = vld [vmem:[#allocation2 + $0x110] sm:$0xff]
          %v1248 = vld [vmem:[#allocation2 + $0x118] sm:$0xff]
          %v1249 = vld [vmem:[#allocation2 + $0x120] sm:$0xff]
          %v1250 = vld [vmem:[#allocation2 + $0x128] sm:$0xff]
          %v1251 = vld [vmem:[#allocation2 + $0x130] sm:$0xff]
          %v1252 = vld [vmem:[#allocation2 + $0x138] sm:$0xff]
          %v1253 = vld [vmem:[#allocation2 + $0x140] sm:$0xff]
          %v1254 = vld [vmem:[#allocation2 + $0x148] sm:$0xff]
          %v1255 = vld [vmem:[#allocation2 + $0x150] sm:$0xff]
          %v1256 = vld [vmem:[#allocation2 + $0x158] sm:$0xff]
          %v1257 = vld [vmem:[#allocation2 + $0x160] sm:$0xff]
          %v1258 = vld [vmem:[#allocation2 + $0x168] sm:$0xff]
          %v1259 = vld [vmem:[#allocation2 + $0x170] sm:$0xff]
          %v1260 = vld [vmem:[#allocation2 + $0x178] sm:$0xff]
          %v1261 = vld [vmem:[#allocation2 + $0x180] sm:$0xff]
          %v1262 = vld [vmem:[#allocation2 + $0x188] sm:$0xff]
          %v1263 = vld [vmem:[#allocation2 + $0x190] sm:$0xff]
          %v1264 = vld [vmem:[#allocation2 + $0x198] sm:$0xff]
          %v1265 = vld [vmem:[#allocation2 + $0x1a0] sm:$0xff]
          %v1266 = vld [vmem:[#allocation2 + $0x1a8] sm:$0xff]
          %v1267 = vld [vmem:[#allocation2 + $0x1b0] sm:$0xff]
          %v1268 = vld [vmem:[#allocation2 + $0x1b8] sm:$0xff]
          %v1269 = vld [vmem:[#allocation2 + $0x1c0] sm:$0xff]
          %v1270 = vld [vmem:[#allocation2 + $0x1c8] sm:$0xff]
          %v1271 = vld [vmem:[#allocation2 + $0x1d0] sm:$0xff]
          %v1272 = vld [vmem:[#allocation2 + $0x1d8] sm:$0xff]
          %v1273 = vld [vmem:[#allocation2 + $0x1e0] sm:$0xff]
          %v1274 = vld [vmem:[#allocation2 + $0x1e8] sm:$0xff]
          %v1275 = vld [vmem:[#allocation2 + $0x1f0] sm:$0xff]
          %v1276 = vld [vmem:[#allocation2 + $0x1f8] sm:$0xff]
          %v1277 = vld [vmem:[%s2] sm:$0x3]
          %v1279 = vlaneseq
          %v1280 = vshrl.u32 %v1279, 7
          %v1281 = vsub.s32 0, %v1280
          %v1282 = vrot.slane %v1277, %v1281
          %v1283 = vlaneseq
          %v1284 = vshrl.u32 %v1283, 7
          %v1285 = vsub.s32 1, %v1284
          %v1286 = vrot.slane %v1277, %v1285
          %v1289 = vadd.f32 %v1213, %v1282
          %v1290 = vadd.f32 %v1214, %v1286
          %v1291 = vadd.f32 %v1215, %v1282
          %v1292 = vadd.f32 %v1216, %v1286
          %v1293 = vadd.f32 %v1217, %v1282
          %v1294 = vadd.f32 %v1218, %v1286
          %v1295 = vadd.f32 %v1219, %v1282
          %v1296 = vadd.f32 %v1220, %v1286
          %v1297 = vadd.f32 %v1221, %v1282
          %v1298 = vadd.f32 %v1222, %v1286
          %v1299 = vadd.f32 %v1223, %v1282
          %v1300 = vadd.f32 %v1224, %v1286
          %v1301 = vadd.f32 %v1225, %v1282
          %v1302 = vadd.f32 %v1226, %v1286
          %v1303 = vadd.f32 %v1227, %v1282
          %v1304 = vadd.f32 %v1228, %v1286
          %v1305 = vadd.f32 %v1229, %v1282
          %v1306 = vadd.f32 %v1230, %v1286
          %v1307 = vadd.f32 %v1231, %v1282
          %v1308 = vadd.f32 %v1232, %v1286
          %v1309 = vadd.f32 %v1233, %v1282
          %v1310 = vadd.f32 %v1234, %v1286
          %v1311 = vadd.f32 %v1235, %v1282
          %v1312 = vadd.f32 %v1236, %v1286
          %v1313 = vadd.f32 %v1237, %v1282
          %v1314 = vadd.f32 %v1238, %v1286
          %v1315 = vadd.f32 %v1239, %v1282
          %v1316 = vadd.f32 %v1240, %v1286
          %v1317 = vadd.f32 %v1241, %v1282
          %v1318 = vadd.f32 %v1242, %v1286
          %v1319 = vadd.f32 %v1243, %v1282
          %v1320 = vadd.f32 %v1244, %v1286
          %v1321 = vadd.f32 %v1245, %v1282
          %v1322 = vadd.f32 %v1246, %v1286
          %v1323 = vadd.f32 %v1247, %v1282
          %v1324 = vadd.f32 %v1248, %v1286
          %v1325 = vadd.f32 %v1249, %v1282
          %v1326 = vadd.f32 %v1250, %v1286
          %v1327 = vadd.f32 %v1251, %v1282
          %v1328 = vadd.f32 %v1252, %v1286
          %v1329 = vadd.f32 %v1253, %v1282
          %v1330 = vadd.f32 %v1254, %v1286
          %v1331 = vadd.f32 %v1255, %v1282
          %v1332 = vadd.f32 %v1256, %v1286
          %v1333 = vadd.f32 %v1257, %v1282
          %v1334 = vadd.f32 %v1258, %v1286
          %v1335 = vadd.f32 %v1259, %v1282
          %v1336 = vadd.f32 %v1260, %v1286
          %v1337 = vadd.f32 %v1261, %v1282
          %v1338 = vadd.f32 %v1262, %v1286
          %v1339 = vadd.f32 %v1263, %v1282
          %v1340 = vadd.f32 %v1264, %v1286
          %v1341 = vadd.f32 %v1265, %v1282
          %v1342 = vadd.f32 %v1266, %v1286
          %v1343 = vadd.f32 %v1267, %v1282
          %v1344 = vadd.f32 %v1268, %v1286
          %v1345 = vadd.f32 %v1269, %v1282
          %v1346 = vadd.f32 %v1270, %v1286
          %v1347 = vadd.f32 %v1271, %v1282
          %v1348 = vadd.f32 %v1272, %v1286
          %v1349 = vadd.f32 %v1273, %v1282
          %v1350 = vadd.f32 %v1274, %v1286
          %v1351 = vadd.f32 %v1275, %v1282
          %v1352 = vadd.f32 %v1276, %v1286
          %1353 = vxpose.xlu0.b32.start [1/16] %v1289, 128
          %1354 = vxpose.xlu0.b32.cont [2/16] %v1291, 128
          %1355 = vxpose.xlu0.b32.cont [3/16] %v1293, 128
          %1356 = vxpose.xlu0.b32.cont [4/16] %v1295, 128
          %1357 = vxpose.xlu0.b32.cont [5/16] %v1297, 128
          %1358 = vxpose.xlu0.b32.cont [6/16] %v1299, 128
          %1359 = vxpose.xlu0.b32.cont [7/16] %v1301, 128
          %1360 = vxpose.xlu0.b32.cont [8/16] %v1303, 128
          %1361 = vxpose.xlu0.b32.cont [9/16] %v1305, 128
          %1362 = vxpose.xlu0.b32.cont [10/16] %v1307, 128
          %1363 = vxpose.xlu0.b32.cont [11/16] %v1309, 128
          %1364 = vxpose.xlu0.b32.cont [12/16] %v1311, 128
          %1365 = vxpose.xlu0.b32.cont [13/16] %v1313, 128
          %1366 = vxpose.xlu0.b32.cont [14/16] %v1315, 128
          %1367 = vxpose.xlu0.b32.cont [15/16] %v1317, 128
          %1368 = vxpose.xlu0.b32.end [16/16] %v1319, 128
          %v1369 = vpop.trf.xlu0
          %v1370 = vpop.trf.xlu0
          %v1371 = vpop.trf.xlu0
          %v1372 = vpop.trf.xlu0
          %v1373 = vpop.trf.xlu0
          %v1374 = vpop.trf.xlu0
          %v1375 = vpop.trf.xlu0
          %v1376 = vpop.trf.xlu0
          %v1377 = vpop.trf.xlu0
          %v1378 = vpop.trf.xlu0
          %v1379 = vpop.trf.xlu0
          %v1380 = vpop.trf.xlu0
          %v1381 = vpop.trf.xlu0
          %v1382 = vpop.trf.xlu0
          %v1383 = vpop.trf.xlu0
          %v1384 = vpop.trf.xlu0
          %1385 = vxpose.xlu0.b32.start [1/16] %v1290, 128
          %1386 = vxpose.xlu0.b32.cont [2/16] %v1292, 128
          %1387 = vxpose.xlu0.b32.cont [3/16] %v1294, 128
          %1388 = vxpose.xlu0.b32.cont [4/16] %v1296, 128
          %1389 = vxpose.xlu0.b32.cont [5/16] %v1298, 128
          %1390 = vxpose.xlu0.b32.cont [6/16] %v1300, 128
          %1391 = vxpose.xlu0.b32.cont [7/16] %v1302, 128
          %1392 = vxpose.xlu0.b32.cont [8/16] %v1304, 128
          %1393 = vxpose.xlu0.b32.cont [9/16] %v1306, 128
          %1394 = vxpose.xlu0.b32.cont [10/16] %v1308, 128
          %1395 = vxpose.xlu0.b32.cont [11/16] %v1310, 128
          %1396 = vxpose.xlu0.b32.cont [12/16] %v1312, 128
          %1397 = vxpose.xlu0.b32.cont [13/16] %v1314, 128
          %1398 = vxpose.xlu0.b32.cont [14/16] %v1316, 128
          %1399 = vxpose.xlu0.b32.cont [15/16] %v1318, 128
          %1400 = vxpose.xlu0.b32.end [16/16] %v1320, 128
          %v1401 = vpop.trf.xlu0
          %v1402 = vpop.trf.xlu0
          %v1403 = vpop.trf.xlu0
          %v1404 = vpop.trf.xlu0
          %v1405 = vpop.trf.xlu0
          %v1406 = vpop.trf.xlu0
          %v1407 = vpop.trf.xlu0
          %v1408 = vpop.trf.xlu0
          %v1409 = vpop.trf.xlu0
          %v1410 = vpop.trf.xlu0
          %v1411 = vpop.trf.xlu0
          %v1412 = vpop.trf.xlu0
          %v1413 = vpop.trf.xlu0
          %v1414 = vpop.trf.xlu0
          %v1415 = vpop.trf.xlu0
          %v1416 = vpop.trf.xlu0
          %1417 = vxpose.xlu0.b32.start [1/16] %v1321, 128
          %1418 = vxpose.xlu0.b32.cont [2/16] %v1323, 128
          %1419 = vxpose.xlu0.b32.cont [3/16] %v1325, 128
          %1420 = vxpose.xlu0.b32.cont [4/16] %v1327, 128
          %1421 = vxpose.xlu0.b32.cont [5/16] %v1329, 128
          %1422 = vxpose.xlu0.b32.cont [6/16] %v1331, 128
          %1423 = vxpose.xlu0.b32.cont [7/16] %v1333, 128
          %1424 = vxpose.xlu0.b32.cont [8/16] %v1335, 128
          %1425 = vxpose.xlu0.b32.cont [9/16] %v1337, 128
          %1426 = vxpose.xlu0.b32.cont [10/16] %v1339, 128
          %1427 = vxpose.xlu0.b32.cont [11/16] %v1341, 128
          %1428 = vxpose.xlu0.b32.cont [12/16] %v1343, 128
          %1429 = vxpose.xlu0.b32.cont [13/16] %v1345, 128
          %1430 = vxpose.xlu0.b32.cont [14/16] %v1347, 128
          %1431 = vxpose.xlu0.b32.cont [15/16] %v1349, 128
          %1432 = vxpose.xlu0.b32.end [16/16] %v1351, 128
          %v1433 = vpop.trf.xlu0
          %v1434 = vpop.trf.xlu0
          %v1435 = vpop.trf.xlu0
          %v1436 = vpop.trf.xlu0
          %v1437 = vpop.trf.xlu0
          %v1438 = vpop.trf.xlu0
          %v1439 = vpop.trf.xlu0
          %v1440 = vpop.trf.xlu0
          %v1441 = vpop.trf.xlu0
          %v1442 = vpop.trf.xlu0
          %v1443 = vpop.trf.xlu0
          %v1444 = vpop.trf.xlu0
          %v1445 = vpop.trf.xlu0
          %v1446 = vpop.trf.xlu0
          %v1447 = vpop.trf.xlu0
          %v1448 = vpop.trf.xlu0
          %1449 = vxpose.xlu0.b32.start [1/16] %v1322, 128
          %1450 = vxpose.xlu0.b32.cont [2/16] %v1324, 128
          %1451 = vxpose.xlu0.b32.cont [3/16] %v1326, 128
          %1452 = vxpose.xlu0.b32.cont [4/16] %v1328, 128
          %1453 = vxpose.xlu0.b32.cont [5/16] %v1330, 128
          %1454 = vxpose.xlu0.b32.cont [6/16] %v1332, 128
          %1455 = vxpose.xlu0.b32.cont [7/16] %v1334, 128
          %1456 = vxpose.xlu0.b32.cont [8/16] %v1336, 128
          %1457 = vxpose.xlu0.b32.cont [9/16] %v1338, 128
          %1458 = vxpose.xlu0.b32.cont [10/16] %v1340, 128
          %1459 = vxpose.xlu0.b32.cont [11/16] %v1342, 128
          %1460 = vxpose.xlu0.b32.cont [12/16] %v1344, 128
          %1461 = vxpose.xlu0.b32.cont [13/16] %v1346, 128
          %1462 = vxpose.xlu0.b32.cont [14/16] %v1348, 128
          %1463 = vxpose.xlu0.b32.cont [15/16] %v1350, 128
          %1464 = vxpose.xlu0.b32.end [16/16] %v1352, 128
          %v1465 = vpop.trf.xlu0
          %v1466 = vpop.trf.xlu0
          %v1467 = vpop.trf.xlu0
          %v1468 = vpop.trf.xlu0
          %v1469 = vpop.trf.xlu0
          %v1470 = vpop.trf.xlu0
          %v1471 = vpop.trf.xlu0
          %v1472 = vpop.trf.xlu0
          %v1473 = vpop.trf.xlu0
          %v1474 = vpop.trf.xlu0
          %v1475 = vpop.trf.xlu0
          %v1476 = vpop.trf.xlu0
          %v1477 = vpop.trf.xlu0
          %v1478 = vpop.trf.xlu0
          %v1479 = vpop.trf.xlu0
          %v1480 = vpop.trf.xlu0
          %1481 = vst [vmem:[%s371] sm:$0xff] %v1369
          %1482 = vst [vmem:[%s371 + $0x8] sm:$0xff] %v1433
          %1483 = vst [vmem:[%s371 + $0x10] sm:$0xff] %v1370
          %1484 = vst [vmem:[%s371 + $0x18] sm:$0xff] %v1434
          %1485 = vst [vmem:[%s371 + $0x20] sm:$0xff] %v1371
          %1486 = vst [vmem:[%s371 + $0x28] sm:$0xff] %v1435
          %1487 = vst [vmem:[%s371 + $0x30] sm:$0xff] %v1372
          %1488 = vst [vmem:[%s371 + $0x38] sm:$0xff] %v1436
          %1489 = vst [vmem:[%s371 + $0x40] sm:$0xff] %v1373
          %1490 = vst [vmem:[%s371 + $0x48] sm:$0xff] %v1437
          %1491 = vst [vmem:[%s371 + $0x50] sm:$0xff] %v1374
          %1492 = vst [vmem:[%s371 + $0x58] sm:$0xff] %v1438
          %1493 = vst [vmem:[%s371 + $0x60] sm:$0xff] %v1375
          %1494 = vst [vmem:[%s371 + $0x68] sm:$0xff] %v1439
          %1495 = vst [vmem:[%s371 + $0x70] sm:$0xff] %v1376
          %1496 = vst [vmem:[%s371 + $0x78] sm:$0xff] %v1440
          %1497 = vst [vmem:[%s371 + $0x80] sm:$0xff] %v1377
          %1498 = vst [vmem:[%s371 + $0x88] sm:$0xff] %v1441
          %1499 = vst [vmem:[%s371 + $0x90] sm:$0xff] %v1378
          %1500 = vst [vmem:[%s371 + $0x98] sm:$0xff] %v1442
          %1501 = vst [vmem:[%s371 + $0xa0] sm:$0xff] %v1379
          %1502 = vst [vmem:[%s371 + $0xa8] sm:$0xff] %v1443
          %1503 = vst [vmem:[%s371 + $0xb0] sm:$0xff] %v1380
          %1504 = vst [vmem:[%s371 + $0xb8] sm:$0xff] %v1444
          %1505 = vst [vmem:[%s371 + $0xc0] sm:$0xff] %v1381
          %1506 = vst [vmem:[%s371 + $0xc8] sm:$0xff] %v1445
          %1507 = vst [vmem:[%s371 + $0xd0] sm:$0xff] %v1382
          %1508 = vst [vmem:[%s371 + $0xd8] sm:$0xff] %v1446
          %1509 = vst [vmem:[%s371 + $0xe0] sm:$0xff] %v1383
          %1510 = vst [vmem:[%s371 + $0xe8] sm:$0xff] %v1447
          %1511 = vst [vmem:[%s371 + $0xf0] sm:$0xff] %v1384
          %1512 = vst [vmem:[%s371 + $0xf8] sm:$0xff] %v1448
          %1513 = vst [vmem:[%s371 + $0x100] sm:$0xff] %v1401
          %1514 = vst [vmem:[%s371 + $0x108] sm:$0xff] %v1465
          %1515 = vst [vmem:[%s371 + $0x110] sm:$0xff] %v1402
          %1516 = vst [vmem:[%s371 + $0x118] sm:$0xff] %v1466
          %1517 = vst [vmem:[%s371 + $0x120] sm:$0xff] %v1403
          %1518 = vst [vmem:[%s371 + $0x128] sm:$0xff] %v1467
          %1519 = vst [vmem:[%s371 + $0x130] sm:$0xff] %v1404
          %1520 = vst [vmem:[%s371 + $0x138] sm:$0xff] %v1468
          %1521 = vst [vmem:[%s371 + $0x140] sm:$0xff] %v1405
          %1522 = vst [vmem:[%s371 + $0x148] sm:$0xff] %v1469
          %1523 = vst [vmem:[%s371 + $0x150] sm:$0xff] %v1406
          %1524 = vst [vmem:[%s371 + $0x158] sm:$0xff] %v1470
          %1525 = vst [vmem:[%s371 + $0x160] sm:$0xff] %v1407
          %1526 = vst [vmem:[%s371 + $0x168] sm:$0xff] %v1471
          %1527 = vst [vmem:[%s371 + $0x170] sm:$0xff] %v1408
          %1528 = vst [vmem:[%s371 + $0x178] sm:$0xff] %v1472
          %1529 = vst [vmem:[%s371 + $0x180] sm:$0xff] %v1409
          %1530 = vst [vmem:[%s371 + $0x188] sm:$0xff] %v1473
          %1531 = vst [vmem:[%s371 + $0x190] sm:$0xff] %v1410
          %1532 = vst [vmem:[%s371 + $0x198] sm:$0xff] %v1474
          %1533 = vst [vmem:[%s371 + $0x1a0] sm:$0xff] %v1411
          %1534 = vst [vmem:[%s371 + $0x1a8] sm:$0xff] %v1475
          %1535 = vst [vmem:[%s371 + $0x1b0] sm:$0xff] %v1412
          %1536 = vst [vmem:[%s371 + $0x1b8] sm:$0xff] %v1476
          %1537 = vst [vmem:[%s371 + $0x1c0] sm:$0xff] %v1413
          %1538 = vst [vmem:[%s371 + $0x1c8] sm:$0xff] %v1477
          %1539 = vst [vmem:[%s371 + $0x1d0] sm:$0xff] %v1414
          %1540 = vst [vmem:[%s371 + $0x1d8] sm:$0xff] %v1478
          %1541 = vst [vmem:[%s371 + $0x1e0] sm:$0xff] %v1415
          %1542 = vst [vmem:[%s371 + $0x1e8] sm:$0xff] %v1479
          %1543 = vst [vmem:[%s371 + $0x1f0] sm:$0xff] %v1416
          %1544 = vst [vmem:[%s371 + $0x1f8] sm:$0xff] %v1480
        $region78: #{sam_adapter_forward.1} parent=65 // pred_fallthru
          _
        %p1545 = scmp.lt.s32.totalorder %s18, 1
        %s1546 = scalar_select %p1545, %s18, 1
        %s1547 = smul.addr %s1546, 64
        %s1548 = smul.addr %s1547, 8
        %s1549 = scalar_lea.vmem %s3, %s1548
        // Predicated region
        $region79: #{sam_adapter_forward.1} parent=65 // pred_check
          %p1550 = pneg %p119
        $region80: #{sam_adapter_forward.1} parent=65 // pred_check_branch
          %1552 = sbr.rel (%p1550) target = $region82
        $region81: #{sam_adapter_forward.1} parent=65 // pred_region
          _
        $region82: #{sam_adapter_forward.1} parent=65 // pred_fallthru
          _
      $region66: #{sam_adapter_forward.1} parent=5 // pred_fallthru
        _
      %p1553 = scmp.le.s32.totalorder 2, %s9
      // Predicated region
      $region83: #{sam_adapter_forward.1} parent=5 // pred_check
        %p1554 = pneg %p1553
      $region84: #{sam_adapter_forward.1} parent=5 // pred_check_branch
        %1556 = sbr.rel (%p1554) target = $region86
      $region85: #{sam_adapter_forward.1} parent=5 // pred_region
        %s1557 = ssub.s32 %s9, 2
        // Predicated region
        $region87: #{sam_adapter_forward.1} parent=85 // pred_check
          %p1558 = pneg %p125
        $region88: #{sam_adapter_forward.1} parent=85 // pred_check_branch
          %1560 = sbr.rel (%p1558) target = $region90
        $region89: #{sam_adapter_forward.1} parent=85 // pred_region
          %p1561 = scmp.lt.s32.totalorder %s20, 1
          %s1562 = scalar_select %p1561, %s20, 1
          %s1563 = smul.addr %s1562, 64
          %s1564 = smul.addr %s1563, 8
          %s1565 = scalar_lea.vmem %s3, %s1564
        $region90: #{sam_adapter_forward.1} parent=85 // pred_fallthru
          _
      $region86: #{sam_adapter_forward.1} parent=5 // pred_fallthru
        _
    $region6: #{sam_adapter_forward.1} parent=1 // loop_footer
      %s13 = sadd.s32 1, %s9
    $region7: #{sam_adapter_forward.1} parent=1 // loop_footer_branch
      %8 = sbr.rel target = $region3
    $region8: #{sam_adapter_forward.1} parent=1 // loop_exit
      _

</llo_original>
